<compile_context>
chip_gen: v5e
topology: v5e:2x2
jax: 0.10.0
libtpu: 0.0.40
codegen_flags: <defaults>
</compile_context>

<pallas_src>
import functools

import jax
import jax.numpy as jnp
from jax import lax
from jax.experimental import pallas as pl
from jax.experimental.pallas import tpu as pltpu


def _softmax_lastdim(s):
    # Numerically-stable softmax with an EXACT divide (approx reciprocal was
    # the source of the previous correctness failure).
    m = jnp.max(s, axis=-1, keepdims=True)
    e = jnp.exp(s - m)
    return e / jnp.sum(e, axis=-1, keepdims=True)


def _packed_kernel(q_ref, k_ref, v_ref, out_ref, *, inv_temperature):
    """out-only path: all G heads of this step fused into one MXU matmul."""
    G, Lq, Dk = q_ref.shape
    _, Lk, Dv = v_ref.shape

    # Leading-dim merges only (minor dim untouched) -> layout-free reshapes.
    q2 = q_ref[...].reshape(G * Lq, Dk)
    k2 = k_ref[...].reshape(G * Lk, Dk)
    v2 = v_ref[...].reshape(G * Lk, Dv)

    # scores: (G*Lq, G*Lk) in one MXU pass, f32 accumulation, no K transpose.
    s = lax.dot_general(
        q2, k2,
        dimension_numbers=(((1,), (1,)), ((), ())),
        preferred_element_type=jnp.float32,
        precision=lax.Precision.HIGHEST,
    )
    s = s * jnp.float32(inv_temperature)

    # Block-diagonal mask: a query only sees keys of its own head.
    row_head = lax.broadcasted_iota(jnp.int32, s.shape, 0) // Lq
    col_head = lax.broadcasted_iota(jnp.int32, s.shape, 1) // Lk
    s = jnp.where(row_head == col_head, s, jnp.float32(-1e30))

    p = _softmax_lastdim(s)  # off-diagonal probabilities are exactly 0

    out = lax.dot_general(
        p.astype(v2.dtype), v2,
        dimension_numbers=(((1,), (0,)), ((), ())),
        preferred_element_type=jnp.float32,
        precision=lax.Precision.HIGHEST,
    )
    out_ref[...] = out.reshape(G, Lq, Dv).astype(out_ref.dtype)


def _batched_kernel(q_ref, k_ref, v_ref, out_ref, attn_ref, *, inv_temperature):
    """attn-returning path: per-head batched dot_general (non-production)."""
    q = q_ref[...]            # (G, Lq, Dk)
    k = k_ref[...]            # (G, Lk, Dk)
    v = v_ref[...]            # (G, Lk, Dv)

    s = lax.dot_general(
        q, k,
        dimension_numbers=(((2,), (2,)), ((0,), (0,))),
        preferred_element_type=jnp.float32,
        precision=lax.Precision.HIGHEST,
    )
    s = s * jnp.float32(inv_temperature)

    p = _softmax_lastdim(s)

    out = lax.dot_general(
        p.astype(v.dtype), v,
        dimension_numbers=(((2,), (1,)), ((0,), (0,))),
        preferred_element_type=jnp.float32,
        precision=lax.Precision.HIGHEST,
    )
    out_ref[...] = out.astype(out_ref.dtype)
    attn_ref[...] = p.astype(attn_ref.dtype)


def _choose_group_size(bh, lq, lk, dk, dv, itemsize, return_attn,
                       packed_limit=256, block_budget_bytes=8 * 1024 * 1024):
    """Largest divisor of BH such that per-step blocks fit a VMEM budget,
    the packed score matmul stays within ~one 256-wide MXU pass, and (when
    possible) num_groups >= 2 so v7x's two TensorCores both get work."""
    per_head = (lq * dk + lk * dk + lk * dv + lq * dv) * itemsize
    if return_attn:
        per_head += lq * lk * itemsize
    g = max(1, min(bh, block_budget_bytes // max(per_head, 1)))
    g = min(g, max(1, packed_limit // max(lq, lk, 1)))
    if bh >= 2:
        g = min(g, bh // 2)          # keep >= 2 grid steps for cross-TC sharding
    g = max(g, 1)
    while bh % g:
        g -= 1
    return g


def scaled_dot_product_attention(q, k, v, temperature, mask=None,
                                 return_attn=True, compute_dtype=None):
    """q: [B,H,Lq,Dk], k: [B,H,Lk,Dk], v: [B,H,Lk,Dv] -> (out, attn) or out."""
    if mask is not None:
        # TODO(synk): optional `mask` (masked_fill(mask == 0, -1e9)) not wired in.
        raise NotImplementedError("mask is not supported by this Pallas kernel")

    B, H, Lq, Dk = q.shape
    Lk = k.shape[2]
    Dv = v.shape[3]
    BH = B * H
    out_dtype = q.dtype

    if compute_dtype is not None:
        q = q.astype(compute_dtype)
        k = k.astype(compute_dtype)
        v = v.astype(compute_dtype)

    qf = q.reshape(BH, Lq, Dk)
    kf = k.reshape(BH, Lk, Dk)
    vf = v.reshape(BH, Lk, Dv)

    itemsize = jnp.dtype(qf.dtype).itemsize
    G = _choose_group_size(BH, Lq, Lk, Dk, Dv, itemsize, return_attn)
    num_groups = BH // G

    inv_temperature = 1.0 / float(temperature)

    in_specs = [
        pl.BlockSpec((G, Lq, Dk), lambda i: (i, 0, 0)),
        pl.BlockSpec((G, Lk, Dk), lambda i: (i, 0, 0)),
        pl.BlockSpec((G, Lk, Dv), lambda i: (i, 0, 0)),
    ]

    if return_attn:
        kernel = functools.partial(_batched_kernel, inv_temperature=inv_temperature)
        out_shape = (
            jax.ShapeDtypeStruct((BH, Lq, Dv), out_dtype),
            jax.ShapeDtypeStruct((BH, Lq, Lk), out_dtype),
        )
        out_specs = [
            pl.BlockSpec((G, Lq, Dv), lambda i: (i, 0, 0)),
            pl.BlockSpec((G, Lq, Lk), lambda i: (i, 0, 0)),
        ]
    else:
        kernel = functools.partial(_packed_kernel, inv_temperature=inv_temperature)
        out_shape = jax.ShapeDtypeStruct((BH, Lq, Dv), out_dtype)
        out_specs = pl.BlockSpec((G, Lq, Dv), lambda i: (i, 0, 0))

    result = pl.pallas_call(
        kernel,
        out_shape=out_shape,
        grid_spec=pltpu.PrefetchScalarGridSpec(
            num_scalar_prefetch=0,
            grid=(num_groups,),
            in_specs=in_specs,
            out_specs=out_specs,
        ),
        compiler_params=pltpu.CompilerParams(
            dimension_semantics=("parallel",),
            # Blocks are small; 32 MiB is safe across v5e/v6e/v7x scoped limits.
            vmem_limit_bytes=32 * 1024 * 1024,
        ),
    )(qf, kf, vf)

    if return_attn:
        out_f, attn_f = result
        return out_f.reshape(B, H, Lq, Dv), attn_f.reshape(B, H, Lq, Lk)
    return result.reshape(B, H, Lq, Dv)


def _reference(q, k, v, temperature):
    s = jnp.einsum("bhqd,bhkd->bhqk", q / temperature, k,
                   precision=lax.Precision.HIGHEST)
    attn = jax.nn.softmax(s, axis=-1)
    out = jnp.einsum("bhqk,bhkd->bhqd", attn, v,
                     precision=lax.Precision.HIGHEST)
    return out, attn


if __name__ == "__main__":
    B, H, Lq, Lk, D = 2, 4, 8, 8, 32
    temperature = float(D) ** 0.5  # typical sqrt(d_k) temperature

    key = jax.random.PRNGKey(0)
    kq, kk, kv = jax.random.split(key, 3)
    q = jax.random.normal(kq, (B, H, Lq, D), dtype=jnp.float32)
    k = jax.random.normal(kk, (B, H, Lk, D), dtype=jnp.float32)
    v = jax.random.normal(kv, (B, H, Lk, D), dtype=jnp.float32)

    # attn-returning path (module parity)
    out, attn = scaled_dot_product_attention(q, k, v, temperature)
    out = jax.block_until_ready(out)
    attn = jax.block_until_ready(attn)

    # production path: packed-MXU, no O(L^2) attn writeback
    out_only = jax.block_until_ready(
        scaled_dot_product_attention(q, k, v, temperature, return_attn=False))

    ref_out, ref_attn = _reference(q, k, v, temperature)
    assert jnp.allclose(out, ref_out, atol=1e-4, rtol=1e-4), \
        float(jnp.max(jnp.abs(out - ref_out)))
    assert jnp.allclose(attn, ref_attn, atol=1e-4, rtol=1e-4), \
        float(jnp.max(jnp.abs(attn - ref_attn)))
    assert jnp.allclose(out_only, ref_out, atol=1e-4, rtol=1e-4), \
        float(jnp.max(jnp.abs(out_only - ref_out)))

    print("KERNEL_OK")
</pallas_src>

<mosaic_0001>
module attributes {stable_mosaic.version = 11 : i64} {
  func.func @_batched_kernel(%arg0: i32, %arg1: memref<4x8x32xf32, #tpu.memory_space<vmem>>, %arg2: memref<4x8x32xf32, #tpu.memory_space<vmem>>, %arg3: memref<4x8x32xf32, #tpu.memory_space<vmem>>, %arg4: memref<4x8x32xf32, #tpu.memory_space<vmem>>, %arg5: memref<4x8x8xf32, #tpu.memory_space<vmem>>) attributes {dimension_semantics = [#tpu.dimension_semantics<parallel>], iteration_bounds = array<i64: 2>, scalar_prefetch = 0 : i64, scratch_operands = 0 : i64, tpu.core_type = #tpu.core_type<tc>, window_params = [{transform_indices = @transform_0, window_bounds = array<i64: 4, 8, 32>}, {transform_indices = @transform_1, window_bounds = array<i64: 4, 8, 32>}, {transform_indices = @transform_2, window_bounds = array<i64: 4, 8, 32>}, {transform_indices = @transform_3, window_bounds = array<i64: 4, 8, 32>}, {transform_indices = @transform_4, window_bounds = array<i64: 4, 8, 8>}]} {
    %c0 = arith.constant 0 : index
    %c0_0 = arith.constant 0 : index
    %c0_1 = arith.constant 0 : index
    %0 = vector.load %arg1[%c0, %c0_0, %c0_1] : memref<4x8x32xf32, #tpu.memory_space<vmem>>, vector<4x8x32xf32>
    %c0_2 = arith.constant 0 : index
    %c0_3 = arith.constant 0 : index
    %c0_4 = arith.constant 0 : index
    %1 = vector.load %arg2[%c0_2, %c0_3, %c0_4] : memref<4x8x32xf32, #tpu.memory_space<vmem>>, vector<4x8x32xf32>
    %c0_5 = arith.constant 0 : index
    %c0_6 = arith.constant 0 : index
    %c0_7 = arith.constant 0 : index
    %2 = vector.load %arg3[%c0_5, %c0_6, %c0_7] : memref<4x8x32xf32, #tpu.memory_space<vmem>>, vector<4x8x32xf32>
    %cst = arith.constant dense<0.000000e+00> : vector<4x8x8xf32>
    %3 = tpu.matmul %0, %1, %cst {dimension_numbers = #tpu.dot_dimension_numbers<[2], [2], [1], [1], [0, 0, 0, 1, 1, 1], [0], [0]>, precision = #tpu.contract_precision<fp32>} : vector<4x8x32xf32>, vector<4x8x32xf32>, vector<4x8x8xf32> -> vector<4x8x8xf32>
    %cst_8 = arith.constant 0.176776692 : f32
    %4 = vector.broadcast %cst_8 : f32 to vector<4x8x8xf32>
    %5 = arith.mulf %3, %4 : vector<4x8x8xf32>
    %cst_9 = arith.constant dense<0xFF800000> : vector<4x8xf32>
    %6 = vector.multi_reduction <maximumf>, %5, %cst_9 [2] : vector<4x8x8xf32> to vector<4x8xf32>
    %7 = vector.shape_cast %6 : vector<4x8xf32> to vector<4x8x1xf32>
    %8 = vector.broadcast %7 : vector<4x8x1xf32> to vector<4x8x8xf32>
    %9 = arith.subf %5, %8 : vector<4x8x8xf32>
    %10 = math.exp %9 : vector<4x8x8xf32>
    %cst_10 = arith.constant dense<0.000000e+00> : vector<4x8xf32>
    %11 = vector.multi_reduction <add>, %10, %cst_10 [2] : vector<4x8x8xf32> to vector<4x8xf32>
    %12 = vector.shape_cast %11 : vector<4x8xf32> to vector<4x8x1xf32>
    %13 = vector.broadcast %12 : vector<4x8x1xf32> to vector<4x8x8xf32>
    %14 = arith.divf %10, %13 : vector<4x8x8xf32>
    %cst_11 = arith.constant dense<0.000000e+00> : vector<4x8x32xf32>
    %15 = tpu.matmul %14, %2, %cst_11 {dimension_numbers = #tpu.dot_dimension_numbers<[2], [1], [1], [2], [0, 0, 0, 1, 1, 2], [0], [0]>, precision = #tpu.contract_precision<fp32>} : vector<4x8x8xf32>, vector<4x8x32xf32>, vector<4x8x32xf32> -> vector<4x8x32xf32>
    %c0_12 = arith.constant 0 : index
    %c0_13 = arith.constant 0 : index
    %c0_14 = arith.constant 0 : index
    %16 = vector.load %arg4[%c0_12, %c0_13, %c0_14] : memref<4x8x32xf32, #tpu.memory_space<vmem>>, vector<4x8x32xf32>
    tpu.vector_store %arg4[%c0_12, %c0_13, %c0_14], %15 {strides = array<i32>} : memref<4x8x32xf32, #tpu.memory_space<vmem>>, vector<4x8x32xf32>,
    %c0_15 = arith.constant 0 : index
    %c0_16 = arith.constant 0 : index
    %c0_17 = arith.constant 0 : index
    %17 = vector.load %arg5[%c0_15, %c0_16, %c0_17] : memref<4x8x8xf32, #tpu.memory_space<vmem>>, vector<4x8x8xf32>
    tpu.vector_store %arg5[%c0_15, %c0_16, %c0_17], %14 {strides = array<i32>} : memref<4x8x8xf32, #tpu.memory_space<vmem>>, vector<4x8x8xf32>,
    return
  }
  func.func @transform_0(%arg0: i32) -> (i32, i32, i32) {
    %c0_i32 = arith.constant 0 : i32
    %c0_i32_0 = arith.constant 0 : i32
    %c0_i32_1 = arith.constant 0 : i32
    return %arg0, %c0_i32, %c0_i32_0 : i32, i32, i32
  }
  func.func @transform_1(%arg0: i32) -> (i32, i32, i32) {
    %c0_i32 = arith.constant 0 : i32
    %c0_i32_0 = arith.constant 0 : i32
    %c0_i32_1 = arith.constant 0 : i32
    return %arg0, %c0_i32, %c0_i32_0 : i32, i32, i32
  }
  func.func @transform_2(%arg0: i32) -> (i32, i32, i32) {
    %c0_i32 = arith.constant 0 : i32
    %c0_i32_0 = arith.constant 0 : i32
    %c0_i32_1 = arith.constant 0 : i32
    return %arg0, %c0_i32, %c0_i32_0 : i32, i32, i32
  }
  func.func @transform_3(%arg0: i32) -> (i32, i32, i32) {
    %c0_i32 = arith.constant 0 : i32
    %c0_i32_0 = arith.constant 0 : i32
    %c0_i32_1 = arith.constant 0 : i32
    return %arg0, %c0_i32, %c0_i32_0 : i32, i32, i32
  }
  func.func @transform_4(%arg0: i32) -> (i32, i32, i32) {
    %c0_i32 = arith.constant 0 : i32
    %c0_i32_0 = arith.constant 0 : i32
    %c0_i32_1 = arith.constant 0 : i32
    return %arg0, %c0_i32, %c0_i32_0 : i32, i32, i32
  }
}

</mosaic_0001>

<llo_original>
// kernel: tpu_custom_call.1
$region0: #{tpu_custom_call.1}
  #allocation0 [shape = 'u32[]', space=smem, size = 0x4, offset = 0x4, fixed_abs, tag = 'smem constant byte address 0x4 - core index']
  #allocation1 [shape = 'u32[72,128]{1,0:T(1,128)}', space=vmem, size = 0x9000, scoped, tag = 'internal scratch']
  %s0 = inlined_call_operand.hbm [shape: f32[8,8,32], index: 0, kind: input, shape index: {}]
  %s1 = inlined_call_operand.hbm [shape: f32[8,8,32], index: 1, kind: input, shape index: {}]
  %s2 = inlined_call_operand.hbm [shape: f32[8,8,32], index: 2, kind: input, shape index: {}]
  %s3 = inlined_call_operand.hbm [shape: f32[8,8,32], index: 3, kind: output, shape index: {0}]
  %s4 = inlined_call_operand.hbm [shape: f32[8,8,8], index: 4, kind: output, shape index: {1}]
  %5 = xla_tuple %s3, %s4
  %s6 = sld [smem:[#allocation0]]
  $region65: #{tpu_custom_call.1} parent=0
    _
  %s8 = ssub.s32 1, %s6
  %s9 = scalar_select 0, %s8, %s6
  $region1: #{tpu_custom_call.1} parent=0
    #allocation2 [shape = 'u8[32768]{0}', space=vmem, size = 0x8000, scoped, tag = 'input window, operand 0']
    #allocation3 [shape = 's32[2]{0}', space=sflag, size = 0x8, scoped, tag = 'scoped memory for tpu_custom_call.1']
    #allocation4 [shape = 's32[2]{0}', space=sflag, size = 0x8, scoped, tag = 'scoped memory for tpu_custom_call.1']
    #allocation5 [shape = 'u8[32768]{0}', space=vmem, size = 0x8000, scoped, tag = 'input window, operand 1']
    #allocation6 [shape = 's32[2]{0}', space=sflag, size = 0x8, scoped, tag = 'scoped memory for tpu_custom_call.1']
    #allocation7 [shape = 'u8[32768]{0}', space=vmem, size = 0x8000, scoped, tag = 'input window, operand 2']
    #allocation8 [shape = 'u8[32768]{0}', space=vmem, size = 0x8000, scoped, tag = 'output window, operand 0']
    #allocation9 [shape = 'u8[32768]{0}', space=vmem, size = 0x8000, scoped, tag = 'output window, operand 1']
    #allocation10 [shape = 's32[2]{0}', space=sflag, size = 0x8, scoped, tag = 'scoped memory for tpu_custom_call.1']
    %10 = vsyncpa [#allocation3], 0
    %s11 = scalar_lea.sflag [#allocation3], 1
    %12 = vsyncpa %s11, 0
    %13 = vsyncpa [#allocation6], 0
    %s14 = scalar_lea.sflag [#allocation6], 1
    %15 = vsyncpa %s14, 0
    %16 = vsyncpa [#allocation4], 0
    %s17 = scalar_lea.sflag [#allocation4], 1
    %18 = vsyncpa %s17, 0
    %19 = vsyncpa [#allocation10], 0
    %s20 = scalar_lea.sflag [#allocation10], 1
    %21 = vsyncpa %s20, 0
    loop: start=0, step=1, limit=4
    $region2: #{tpu_custom_call.1} parent=1 // loop_pre_header
      _
    $region3: #{tpu_custom_call.1} parent=1 // loop_header
      %s23 = sphi 0, %s27
      %p24 = scmp.ge.s32.totalorder %s23, 4
      %s33 = sphi 0, %s35
      %s36 = sphi 0, %s33
      %s37 = sphi 0, %s36
      %s53 = sphi 0, %s37
      %s59 = sphi 0, %s61
      %s62 = sphi 0, %s59
      %s63 = sphi 0, %s62
      %s79 = sphi 0, %s63
      %s85 = sphi 0, %s87
      %s88 = sphi 0, %s85
      %s89 = sphi 0, %s88
      %s105 = sphi 0, %s89
      %s111 = sphi 0, %s113
      %s114 = sphi 0, %s111
      %s115 = sphi 0, %s114
      %s131 = sphi 0, %s115
      %s137 = sphi 0, %s139
      %s140 = sphi 0, %s137
      %s141 = sphi 0, %s140
      %s157 = sphi 0, %s141
    $region4: #{tpu_custom_call.1} parent=1 // loop_header_branch
      %26 = sbr.rel (%p24) target = $region8
    $region5: #{tpu_custom_call.1} parent=1 // loop_body
      %s28 = ssub.s32 %s23, 1
      %s29 = ssub.s32 %s23, 2
      %s30 = sadd.s32 %s23, 1
      %s31 = ssub.s32 %s23, %s30
      %p32 = scmp.eq.s32.totalorder %s31, 0
      %s34 = sadd.s32 %s33, 1
      %s35 = scalar_select %p32, %s33, %s34
      %p38 = pneg %p32
      %p39 = scmp.eq.s32.totalorder %s23, 1
      %p40 = por %p38, %p39
      %p41 = scmp.ne.s32.totalorder %s33, %s36
      %p42 = scmp.eq.s32.totalorder %s23, 0
      %p43 = por %p41, %p42
      %p44 = scmp.ne.s32.totalorder %s33, %s36
      %p45 = scmp.eq.s32.totalorder %s28, 1
      %p46 = por %p44, %p45
      %p47 = scmp.ne.s32.totalorder %s36, %s37
      %p48 = scmp.eq.s32.totalorder %s28, 0
      %p49 = por %p47, %p48
      %p50 = scmp.ne.s32.totalorder %s36, %s37
      %p51 = scmp.eq.s32.totalorder %s29, 1
      %p52 = por %p50, %p51
      %p54 = scmp.ne.s32.totalorder %s37, %s53
      %p55 = scmp.eq.s32.totalorder %s29, 0
      %p56 = por %p54, %p55
      %s57 = ssub.s32 %s23, %s30
      %p58 = scmp.eq.s32.totalorder %s57, 0
      %s60 = sadd.s32 %s59, 1
      %s61 = scalar_select %p58, %s59, %s60
      %p64 = pneg %p58
      %p65 = scmp.eq.s32.totalorder %s23, 1
      %p66 = por %p64, %p65
      %p67 = scmp.ne.s32.totalorder %s59, %s62
      %p68 = scmp.eq.s32.totalorder %s23, 0
      %p69 = por %p67, %p68
      %p70 = scmp.ne.s32.totalorder %s59, %s62
      %p71 = scmp.eq.s32.totalorder %s28, 1
      %p72 = por %p70, %p71
      %p73 = scmp.ne.s32.totalorder %s62, %s63
      %p74 = scmp.eq.s32.totalorder %s28, 0
      %p75 = por %p73, %p74
      %p76 = scmp.ne.s32.totalorder %s62, %s63
      %p77 = scmp.eq.s32.totalorder %s29, 1
      %p78 = por %p76, %p77
      %p80 = scmp.ne.s32.totalorder %s63, %s79
      %p81 = scmp.eq.s32.totalorder %s29, 0
      %p82 = por %p80, %p81
      %s83 = ssub.s32 %s23, %s30
      %p84 = scmp.eq.s32.totalorder %s83, 0
      %s86 = sadd.s32 %s85, 1
      %s87 = scalar_select %p84, %s85, %s86
      %p90 = pneg %p84
      %p91 = scmp.eq.s32.totalorder %s23, 1
      %p92 = por %p90, %p91
      %p93 = scmp.ne.s32.totalorder %s85, %s88
      %p94 = scmp.eq.s32.totalorder %s23, 0
      %p95 = por %p93, %p94
      %p96 = scmp.ne.s32.totalorder %s85, %s88
      %p97 = scmp.eq.s32.totalorder %s28, 1
      %p98 = por %p96, %p97
      %p99 = scmp.ne.s32.totalorder %s88, %s89
      %p100 = scmp.eq.s32.totalorder %s28, 0
      %p101 = por %p99, %p100
      %p102 = scmp.ne.s32.totalorder %s88, %s89
      %p103 = scmp.eq.s32.totalorder %s29, 1
      %p104 = por %p102, %p103
      %p106 = scmp.ne.s32.totalorder %s89, %s105
      %p107 = scmp.eq.s32.totalorder %s29, 0
      %p108 = por %p106, %p107
      %s109 = ssub.s32 %s23, %s30
      %p110 = scmp.eq.s32.totalorder %s109, 0
      %s112 = sadd.s32 %s111, 1
      %s113 = scalar_select %p110, %s111, %s112
      %p116 = pneg %p110
      %p117 = scmp.eq.s32.totalorder %s23, 1
      %p118 = por %p116, %p117
      %p119 = scmp.ne.s32.totalorder %s111, %s114
      %p120 = scmp.eq.s32.totalorder %s23, 0
      %p121 = por %p119, %p120
      %p122 = scmp.ne.s32.totalorder %s111, %s114
      %p123 = scmp.eq.s32.totalorder %s28, 1
      %p124 = por %p122, %p123
      %p125 = scmp.ne.s32.totalorder %s114, %s115
      %p126 = scmp.eq.s32.totalorder %s28, 0
      %p127 = por %p125, %p126
      %p128 = scmp.ne.s32.totalorder %s114, %s115
      %p129 = scmp.eq.s32.totalorder %s29, 1
      %p130 = por %p128, %p129
      %p132 = scmp.ne.s32.totalorder %s115, %s131
      %p133 = scmp.eq.s32.totalorder %s29, 0
      %p134 = por %p132, %p133
      %s135 = ssub.s32 %s23, %s30
      %p136 = scmp.eq.s32.totalorder %s135, 0
      %s138 = sadd.s32 %s137, 1
      %s139 = scalar_select %p136, %s137, %s138
      %p142 = pneg %p136
      %p143 = scmp.eq.s32.totalorder %s23, 1
      %p144 = por %p142, %p143
      %p145 = scmp.ne.s32.totalorder %s137, %s140
      %p146 = scmp.eq.s32.totalorder %s23, 0
      %p147 = por %p145, %p146
      %p148 = scmp.ne.s32.totalorder %s137, %s140
      %p149 = scmp.eq.s32.totalorder %s28, 1
      %p150 = por %p148, %p149
      %p151 = scmp.ne.s32.totalorder %s140, %s141
      %p152 = scmp.eq.s32.totalorder %s28, 0
      %p153 = por %p151, %p152
      %p154 = scmp.ne.s32.totalorder %s140, %s141
      %p155 = scmp.eq.s32.totalorder %s29, 1
      %p156 = por %p154, %p155
      %p158 = scmp.ne.s32.totalorder %s141, %s157
      %p159 = scmp.eq.s32.totalorder %s29, 0
      %p160 = por %p158, %p159
      %p161 = scmp.le.s32.totalorder 1, %s23
      %p162 = scmp.lt.s32.totalorder %s23, 3
      %p163 = pnand %p161, %p162
      %p164 = pneg %p163
      // Predicated region
      $region9: #{tpu_custom_call.1} parent=5 // pred_check
        _
      $region10: #{tpu_custom_call.1} parent=5 // pred_check_branch
        %166 = sbr.rel (%p163) target = $region12
      $region11: #{tpu_custom_call.1} parent=5 // pred_region
        %s167 = ssub.s32 %s23, 1
      $region12: #{tpu_custom_call.1} parent=5 // pred_fallthru
        _
      %p168 = scmp.lt.s32.totalorder %s23, 2
      // Predicated region
      $region13: #{tpu_custom_call.1} parent=5 // pred_check
        %p169 = pneg %p168
      $region14: #{tpu_custom_call.1} parent=5 // pred_check_branch
        %171 = sbr.rel (%p169) target = $region16
      $region15: #{tpu_custom_call.1} parent=5 // pred_region
        // Predicated region
        $region17: #{tpu_custom_call.1} parent=15 // pred_check
          %p172 = pneg %p43
        $region18: #{tpu_custom_call.1} parent=15 // pred_check_branch
          %174 = sbr.rel (%p172) target = $region20
        $region19: #{tpu_custom_call.1} parent=15 // pred_region
          %s175 = sand.u32 %s33, 1
          %s176 = scalar_lea.sflag [#allocation3], %s175
          %s177 = sand.u32 %s33, 1
          %s178 = smul.addr %s177, 32
          %s179 = scalar_lea.vmem [#allocation2], %s178
          %s180 = smul.u32 4, %s23
          %182 = vsyncadd %s176, 0
          %s183 = smul.addr %s180, 8
          %s184 = scalar_lea.hbm %s0, %s183
          %s185 = sshll.u32 %s184, 4
          %s186 = int_to_ptr.hbm [resolvable:$true] %s185
          %s187 = sshll.u32 %s179, 4
          %s188 = int_to_ptr.vmem [resolvable:$true] %s187
          %193 = dma.hbm_to_vmem [thread:$0]  %s186, 512, %s188, %s176, 128, 128, 8
        $region20: #{tpu_custom_call.1} parent=15 // pred_fallthru
          _
        // Predicated region
        $region21: #{tpu_custom_call.1} parent=15 // pred_check
          %p194 = pneg %p69
        $region22: #{tpu_custom_call.1} parent=15 // pred_check_branch
          %196 = sbr.rel (%p194) target = $region24
        $region23: #{tpu_custom_call.1} parent=15 // pred_region
          %s197 = sand.u32 %s23, 1
          %s198 = scalar_lea.sflag [#allocation6], %s197
          %s199 = sand.u32 %s59, 1
          %s200 = smul.addr %s199, 32
          %s201 = scalar_lea.vmem [#allocation5], %s200
          %s202 = smul.u32 4, %s23
          %204 = vsyncadd %s198, 0
          %s205 = smul.addr %s202, 8
          %s206 = scalar_lea.hbm %s1, %s205
          %s207 = sshll.u32 %s206, 4
          %s208 = int_to_ptr.hbm [resolvable:$true] %s207
          %s209 = sshll.u32 %s201, 4
          %s210 = int_to_ptr.vmem [resolvable:$true] %s209
          %215 = dma.hbm_to_vmem [thread:$0]  %s208, 512, %s210, %s198, 128, 128, 8
        $region24: #{tpu_custom_call.1} parent=15 // pred_fallthru
          _
        // Predicated region
        $region25: #{tpu_custom_call.1} parent=15 // pred_check
          %p216 = pneg %p95
        $region26: #{tpu_custom_call.1} parent=15 // pred_check_branch
          %218 = sbr.rel (%p216) target = $region28
        $region27: #{tpu_custom_call.1} parent=15 // pred_region
          %s219 = sand.u32 %s23, 1
          %s220 = scalar_lea.sflag [#allocation6], %s219
          %s221 = sand.u32 %s85, 1
          %s222 = smul.addr %s221, 32
          %s223 = scalar_lea.vmem [#allocation7], %s222
          %s224 = smul.u32 4, %s23
          %226 = vsyncadd %s220, 0
          %s227 = smul.addr %s224, 8
          %s228 = scalar_lea.hbm %s2, %s227
          %s229 = sshll.u32 %s228, 4
          %s230 = int_to_ptr.hbm [resolvable:$true] %s229
          %s231 = sshll.u32 %s223, 4
          %s232 = int_to_ptr.vmem [resolvable:$true] %s231
          %237 = dma.hbm_to_vmem [thread:$0]  %s230, 512, %s232, %s220, 128, 128, 8
        $region28: #{tpu_custom_call.1} parent=15 // pred_fallthru
          _
      $region16: #{tpu_custom_call.1} parent=5 // pred_fallthru
        _
      %p238 = scmp.le.s32.totalorder 1, %s23
      %p239 = scmp.lt.s32.totalorder %s23, 3
      %p240 = pnand %p238, %p239
      %p241 = pneg %p240
      // Predicated region
      $region29: #{tpu_custom_call.1} parent=5 // pred_check
        _
      $region30: #{tpu_custom_call.1} parent=5 // pred_check_branch
        %243 = sbr.rel (%p240) target = $region32
      $region31: #{tpu_custom_call.1} parent=5 // pred_region
        %s244 = ssub.s32 %s23, 1
        %s245 = sand.u32 %s36, 1
        %s246 = scalar_lea.sflag [#allocation3], %s245
        %s247 = sand.u32 %s36, 1
        %s248 = smul.addr %s247, 32
        %s249 = scalar_lea.vmem [#allocation2], %s248
        // Predicated region
        $region33: #{tpu_custom_call.1} parent=31 // pred_check
          %p250 = pneg %p49
        $region34: #{tpu_custom_call.1} parent=31 // pred_check_branch
          %252 = sbr.rel (%p250) target = $region36
        $region35: #{tpu_custom_call.1} parent=31 // pred_region
          %254 = dma.done %s246, 512
        $region36: #{tpu_custom_call.1} parent=31 // pred_fallthru
          _
        %s255 = sand.u32 %s28, 1
        %s256 = scalar_lea.sflag [#allocation6], %s255
        %s257 = sand.u32 %s62, 1
        %s258 = smul.addr %s257, 32
        %s259 = scalar_lea.vmem [#allocation5], %s258
        // Predicated region
        $region37: #{tpu_custom_call.1} parent=31 // pred_check
          %p260 = pneg %p75
        $region38: #{tpu_custom_call.1} parent=31 // pred_check_branch
          %262 = sbr.rel (%p260) target = $region40
        $region39: #{tpu_custom_call.1} parent=31 // pred_region
          %264 = dma.done %s256, 512
        $region40: #{tpu_custom_call.1} parent=31 // pred_fallthru
          _
        %s265 = sand.u32 %s28, 1
        %s266 = scalar_lea.sflag [#allocation6], %s265
        %s267 = sand.u32 %s88, 1
        %s268 = smul.addr %s267, 32
        %s269 = scalar_lea.vmem [#allocation7], %s268
        // Predicated region
        $region41: #{tpu_custom_call.1} parent=31 // pred_check
          %p270 = pneg %p101
        $region42: #{tpu_custom_call.1} parent=31 // pred_check_branch
          %272 = sbr.rel (%p270) target = $region44
        $region43: #{tpu_custom_call.1} parent=31 // pred_region
          %274 = dma.done %s266, 512
        $region44: #{tpu_custom_call.1} parent=31 // pred_fallthru
          _
        %s275 = sand.u32 %s36, 1
        %s276 = scalar_lea.sflag [#allocation3], %s275
        %s277 = sand.u32 %s36, 1
        %s278 = smul.addr %s277, 32
        %s279 = scalar_lea.vmem [#allocation2], %s278
        %p280 = pneg %p49
        %p281 = pneg %p46
        %s282 = sand.u32 %s28, 1
        %s283 = scalar_lea.sflag [#allocation6], %s282
        %s284 = sand.u32 %s62, 1
        %s285 = smul.addr %s284, 32
        %s286 = scalar_lea.vmem [#allocation5], %s285
        %p287 = pneg %p75
        %p288 = pneg %p72
        %s289 = sand.u32 %s28, 1
        %s290 = scalar_lea.sflag [#allocation6], %s289
        %s291 = sand.u32 %s88, 1
        %s292 = smul.addr %s291, 32
        %s293 = scalar_lea.vmem [#allocation7], %s292
        %p294 = pneg %p101
        %p295 = pneg %p98
        %p296 = pneg %p127
        %p297 = pneg %p124
        %s298 = sand.u32 %s114, 1
        %s299 = scalar_lea.sflag [#allocation4], %s298
        %s300 = sand.u32 %s114, 1
        %s301 = smul.addr %s300, 32
        %s302 = scalar_lea.vmem [#allocation8], %s301
        %p303 = pneg %p153
        %p304 = pneg %p150
        %s305 = sand.u32 %s140, 1
        %s306 = scalar_lea.sflag [#allocation10], %s305
        %s307 = sand.u32 %s140, 1
        %s308 = smul.addr %s307, 32
        %s309 = scalar_lea.vmem [#allocation9], %s308
        %s310 = smul.u32 4, %s28
        %s311 = smul.u32 4, %s28
        %s312 = smul.u32 4, %s28
        %s313 = smul.u32 4, %s28
        %s314 = smul.u32 4, %s28
        %v315 = vld [vmem:[%s249] sm:$0xff]
        %v316 = vld [vmem:[%s249 + $0x8] sm:$0xff]
        %v317 = vld [vmem:[%s249 + $0x10] sm:$0xff]
        %v318 = vld [vmem:[%s249 + $0x18] sm:$0xff]
        %v319 = vld [vmem:[%s259] sm:$0xff]
        %v320 = vld [vmem:[%s259 + $0x8] sm:$0xff]
        %v321 = vld [vmem:[%s259 + $0x10] sm:$0xff]
        %v322 = vld [vmem:[%s259 + $0x18] sm:$0xff]
        %v323 = vld [vmem:[%s269] sm:$0xff]
        %v324 = vld [vmem:[%s269 + $0x8] sm:$0xff]
        %v325 = vld [vmem:[%s269 + $0x10] sm:$0xff]
        %v326 = vld [vmem:[%s269 + $0x18] sm:$0xff]
        %vm327 = vcmask 261120
        %v329 = vsel %vm327, %v315, 0
        %v332 = vsel %vm327, %v319, 0
        %334 = vmatpush.xpose.msra.mxu0 0.0
        %335 = vmatpush.xpose.msra.mxu0 0.0
        %336 = vmatpush.xpose.msra.mxu0 0.0
        %337 = vmatpush.xpose.msra.mxu0 0.0
        %338 = vmatpush.xpose.msra.mxu0 0.0
        %339 = vmatpush.xpose.msra.mxu0 0.0
        %340 = vmatpush.xpose.msra.mxu0 0.0
        %341 = vmatpush.xpose.msra.mxu0 0.0
        %342 = vmatpush.xpose.msra.mxu0 0.0
        %343 = vmatpush.xpose.msra.mxu0 0.0
        %344 = vmatpush.xpose.msra.mxu0 0.0
        %345 = vmatpush.xpose.msra.mxu0 0.0
        %346 = vmatpush.xpose.msra.mxu0 0.0
        %347 = vmatpush.xpose.msra.mxu0 0.0
        %348 = vmatpush.xpose.msra.mxu0 0.0
        %v349 = vand.u32 %v332, 4294901760
        %350 = vmatpush.xpose.msra.mxu0 %v349
        %v351 = vand.u32 %v329, 4294901760
        %v352 = vsub.f32 %v329, %v351
        %v353 = vand.u32 %v352, 4294901760
        %v354 = vsub.f32 %v352, %v353
        %v355 = vand.u32 %v354, 4294901760
        %356 = vmatmul.f32.gmra.mxu0 %v355
        %v357 = vpop.f32.mrf.mxu0
        %v358 = vadd.f32 0.0, %v357
        %359 = vdwg.mxu0
        %360 = vmatpush.xpose.msra.mxu0 0.0
        %361 = vmatpush.xpose.msra.mxu0 0.0
        %362 = vmatpush.xpose.msra.mxu0 0.0
        %363 = vmatpush.xpose.msra.mxu0 0.0
        %364 = vmatpush.xpose.msra.mxu0 0.0
        %365 = vmatpush.xpose.msra.mxu0 0.0
        %366 = vmatpush.xpose.msra.mxu0 0.0
        %367 = vmatpush.xpose.msra.mxu0 0.0
        %368 = vmatpush.xpose.msra.mxu0 0.0
        %369 = vmatpush.xpose.msra.mxu0 0.0
        %370 = vmatpush.xpose.msra.mxu0 0.0
        %371 = vmatpush.xpose.msra.mxu0 0.0
        %372 = vmatpush.xpose.msra.mxu0 0.0
        %373 = vmatpush.xpose.msra.mxu0 0.0
        %374 = vmatpush.xpose.msra.mxu0 0.0
        %v375 = vand.u32 %v332, 4294901760
        %v376 = vsub.f32 %v332, %v375
        %v377 = vand.u32 %v376, 4294901760
        %v378 = vsub.f32 %v376, %v377
        %v379 = vand.u32 %v378, 4294901760
        %380 = vmatpush.xpose.msra.mxu0 %v379
        %v381 = vand.u32 %v329, 4294901760
        %382 = vmatmul.f32.gmra.mxu0 %v381
        %v383 = vpop.f32.mrf.mxu0
        %v384 = vadd.f32 %v358, %v383
        %385 = vdwg.mxu0
        %386 = vmatpush.xpose.msra.mxu0 0.0
        %387 = vmatpush.xpose.msra.mxu0 0.0
        %388 = vmatpush.xpose.msra.mxu0 0.0
        %389 = vmatpush.xpose.msra.mxu0 0.0
        %390 = vmatpush.xpose.msra.mxu0 0.0
        %391 = vmatpush.xpose.msra.mxu0 0.0
        %392 = vmatpush.xpose.msra.mxu0 0.0
        %393 = vmatpush.xpose.msra.mxu0 0.0
        %394 = vmatpush.xpose.msra.mxu0 0.0
        %395 = vmatpush.xpose.msra.mxu0 0.0
        %396 = vmatpush.xpose.msra.mxu0 0.0
        %397 = vmatpush.xpose.msra.mxu0 0.0
        %398 = vmatpush.xpose.msra.mxu0 0.0
        %399 = vmatpush.xpose.msra.mxu0 0.0
        %400 = vmatpush.xpose.msra.mxu0 0.0
        %v401 = vand.u32 %v332, 4294901760
        %v402 = vsub.f32 %v332, %v401
        %403 = vmatpush.xpose.msra.mxu0 %v402
        %v404 = vand.u32 %v329, 4294901760
        %v405 = vsub.f32 %v329, %v404
        %406 = vmatmul.f32.gmra.mxu0 %v405
        %v407 = vpop.f32.mrf.mxu0
        %v408 = vadd.f32 %v384, %v407
        %409 = vdwg.mxu0
        %410 = vmatpush.xpose.msra.mxu0 0.0
        %411 = vmatpush.xpose.msra.mxu0 0.0
        %412 = vmatpush.xpose.msra.mxu0 0.0
        %413 = vmatpush.xpose.msra.mxu0 0.0
        %414 = vmatpush.xpose.msra.mxu0 0.0
        %415 = vmatpush.xpose.msra.mxu0 0.0
        %416 = vmatpush.xpose.msra.mxu0 0.0
        %417 = vmatpush.xpose.msra.mxu0 0.0
        %418 = vmatpush.xpose.msra.mxu0 0.0
        %419 = vmatpush.xpose.msra.mxu0 0.0
        %420 = vmatpush.xpose.msra.mxu0 0.0
        %421 = vmatpush.xpose.msra.mxu0 0.0
        %422 = vmatpush.xpose.msra.mxu0 0.0
        %423 = vmatpush.xpose.msra.mxu0 0.0
        %424 = vmatpush.xpose.msra.mxu0 0.0
        %v425 = vand.u32 %v332, 4294901760
        %426 = vmatpush.xpose.msra.mxu0 %v425
        %v427 = vand.u32 %v329, 4294901760
        %v428 = vsub.f32 %v329, %v427
        %v429 = vand.u32 %v428, 4294901760
        %430 = vmatmul.f32.gmra.mxu0 %v429
        %v431 = vpop.f32.mrf.mxu0
        %v432 = vadd.f32 %v408, %v431
        %433 = vdwg.mxu0
        %434 = vmatpush.xpose.msra.mxu0 0.0
        %435 = vmatpush.xpose.msra.mxu0 0.0
        %436 = vmatpush.xpose.msra.mxu0 0.0
        %437 = vmatpush.xpose.msra.mxu0 0.0
        %438 = vmatpush.xpose.msra.mxu0 0.0
        %439 = vmatpush.xpose.msra.mxu0 0.0
        %440 = vmatpush.xpose.msra.mxu0 0.0
        %441 = vmatpush.xpose.msra.mxu0 0.0
        %442 = vmatpush.xpose.msra.mxu0 0.0
        %443 = vmatpush.xpose.msra.mxu0 0.0
        %444 = vmatpush.xpose.msra.mxu0 0.0
        %445 = vmatpush.xpose.msra.mxu0 0.0
        %446 = vmatpush.xpose.msra.mxu0 0.0
        %447 = vmatpush.xpose.msra.mxu0 0.0
        %448 = vmatpush.xpose.msra.mxu0 0.0
        %v449 = vand.u32 %v332, 4294901760
        %v450 = vsub.f32 %v332, %v449
        %v451 = vand.u32 %v450, 4294901760
        %452 = vmatpush.xpose.msra.mxu0 %v451
        %v453 = vand.u32 %v329, 4294901760
        %454 = vmatmul.f32.gmra.mxu0 %v453
        %v455 = vpop.f32.mrf.mxu0
        %v456 = vadd.f32 %v432, %v455
        %457 = vdwg.mxu0
        %458 = vmatpush.xpose.msra.mxu0 0.0
        %459 = vmatpush.xpose.msra.mxu0 0.0
        %460 = vmatpush.xpose.msra.mxu0 0.0
        %461 = vmatpush.xpose.msra.mxu0 0.0
        %462 = vmatpush.xpose.msra.mxu0 0.0
        %463 = vmatpush.xpose.msra.mxu0 0.0
        %464 = vmatpush.xpose.msra.mxu0 0.0
        %465 = vmatpush.xpose.msra.mxu0 0.0
        %466 = vmatpush.xpose.msra.mxu0 0.0
        %467 = vmatpush.xpose.msra.mxu0 0.0
        %468 = vmatpush.xpose.msra.mxu0 0.0
        %469 = vmatpush.xpose.msra.mxu0 0.0
        %470 = vmatpush.xpose.msra.mxu0 0.0
        %471 = vmatpush.xpose.msra.mxu0 0.0
        %472 = vmatpush.xpose.msra.mxu0 0.0
        %v473 = vand.u32 %v332, 4294901760
        %474 = vmatpush.xpose.msra.mxu0 %v473
        %v475 = vand.u32 %v329, 4294901760
        %476 = vmatmul.f32.gmra.mxu0 %v475
        %v477 = vpop.f32.mrf.mxu0
        %v478 = vadd.f32 %v456, %v477
        %479 = vdwg.mxu0
        %v481 = vsel %vm327, %v316, 0
        %v484 = vsel %vm327, %v320, 0
        %486 = vmatpush.xpose.msra.mxu0 0.0
        %487 = vmatpush.xpose.msra.mxu0 0.0
        %488 = vmatpush.xpose.msra.mxu0 0.0
        %489 = vmatpush.xpose.msra.mxu0 0.0
        %490 = vmatpush.xpose.msra.mxu0 0.0
        %491 = vmatpush.xpose.msra.mxu0 0.0
        %492 = vmatpush.xpose.msra.mxu0 0.0
        %493 = vmatpush.xpose.msra.mxu0 0.0
        %494 = vmatpush.xpose.msra.mxu0 0.0
        %495 = vmatpush.xpose.msra.mxu0 0.0
        %496 = vmatpush.xpose.msra.mxu0 0.0
        %497 = vmatpush.xpose.msra.mxu0 0.0
        %498 = vmatpush.xpose.msra.mxu0 0.0
        %499 = vmatpush.xpose.msra.mxu0 0.0
        %500 = vmatpush.xpose.msra.mxu0 0.0
        %v501 = vand.u32 %v484, 4294901760
        %502 = vmatpush.xpose.msra.mxu0 %v501
        %v503 = vand.u32 %v481, 4294901760
        %v504 = vsub.f32 %v481, %v503
        %v505 = vand.u32 %v504, 4294901760
        %v506 = vsub.f32 %v504, %v505
        %v507 = vand.u32 %v506, 4294901760
        %508 = vmatmul.f32.gmra.mxu0 %v507
        %v509 = vpop.f32.mrf.mxu0
        %v510 = vadd.f32 0.0, %v509
        %511 = vdwg.mxu0
        %512 = vmatpush.xpose.msra.mxu0 0.0
        %513 = vmatpush.xpose.msra.mxu0 0.0
        %514 = vmatpush.xpose.msra.mxu0 0.0
        %515 = vmatpush.xpose.msra.mxu0 0.0
        %516 = vmatpush.xpose.msra.mxu0 0.0
        %517 = vmatpush.xpose.msra.mxu0 0.0
        %518 = vmatpush.xpose.msra.mxu0 0.0
        %519 = vmatpush.xpose.msra.mxu0 0.0
        %520 = vmatpush.xpose.msra.mxu0 0.0
        %521 = vmatpush.xpose.msra.mxu0 0.0
        %522 = vmatpush.xpose.msra.mxu0 0.0
        %523 = vmatpush.xpose.msra.mxu0 0.0
        %524 = vmatpush.xpose.msra.mxu0 0.0
        %525 = vmatpush.xpose.msra.mxu0 0.0
        %526 = vmatpush.xpose.msra.mxu0 0.0
        %v527 = vand.u32 %v484, 4294901760
        %v528 = vsub.f32 %v484, %v527
        %v529 = vand.u32 %v528, 4294901760
        %v530 = vsub.f32 %v528, %v529
        %v531 = vand.u32 %v530, 4294901760
        %532 = vmatpush.xpose.msra.mxu0 %v531
        %v533 = vand.u32 %v481, 4294901760
        %534 = vmatmul.f32.gmra.mxu0 %v533
        %v535 = vpop.f32.mrf.mxu0
        %v536 = vadd.f32 %v510, %v535
        %537 = vdwg.mxu0
        %538 = vmatpush.xpose.msra.mxu0 0.0
        %539 = vmatpush.xpose.msra.mxu0 0.0
        %540 = vmatpush.xpose.msra.mxu0 0.0
        %541 = vmatpush.xpose.msra.mxu0 0.0
        %542 = vmatpush.xpose.msra.mxu0 0.0
        %543 = vmatpush.xpose.msra.mxu0 0.0
        %544 = vmatpush.xpose.msra.mxu0 0.0
        %545 = vmatpush.xpose.msra.mxu0 0.0
        %546 = vmatpush.xpose.msra.mxu0 0.0
        %547 = vmatpush.xpose.msra.mxu0 0.0
        %548 = vmatpush.xpose.msra.mxu0 0.0
        %549 = vmatpush.xpose.msra.mxu0 0.0
        %550 = vmatpush.xpose.msra.mxu0 0.0
        %551 = vmatpush.xpose.msra.mxu0 0.0
        %552 = vmatpush.xpose.msra.mxu0 0.0
        %v553 = vand.u32 %v484, 4294901760
        %v554 = vsub.f32 %v484, %v553
        %555 = vmatpush.xpose.msra.mxu0 %v554
        %v556 = vand.u32 %v481, 4294901760
        %v557 = vsub.f32 %v481, %v556
        %558 = vmatmul.f32.gmra.mxu0 %v557
        %v559 = vpop.f32.mrf.mxu0
        %v560 = vadd.f32 %v536, %v559
        %561 = vdwg.mxu0
        %562 = vmatpush.xpose.msra.mxu0 0.0
        %563 = vmatpush.xpose.msra.mxu0 0.0
        %564 = vmatpush.xpose.msra.mxu0 0.0
        %565 = vmatpush.xpose.msra.mxu0 0.0
        %566 = vmatpush.xpose.msra.mxu0 0.0
        %567 = vmatpush.xpose.msra.mxu0 0.0
        %568 = vmatpush.xpose.msra.mxu0 0.0
        %569 = vmatpush.xpose.msra.mxu0 0.0
        %570 = vmatpush.xpose.msra.mxu0 0.0
        %571 = vmatpush.xpose.msra.mxu0 0.0
        %572 = vmatpush.xpose.msra.mxu0 0.0
        %573 = vmatpush.xpose.msra.mxu0 0.0
        %574 = vmatpush.xpose.msra.mxu0 0.0
        %575 = vmatpush.xpose.msra.mxu0 0.0
        %576 = vmatpush.xpose.msra.mxu0 0.0
        %v577 = vand.u32 %v484, 4294901760
        %578 = vmatpush.xpose.msra.mxu0 %v577
        %v579 = vand.u32 %v481, 4294901760
        %v580 = vsub.f32 %v481, %v579
        %v581 = vand.u32 %v580, 4294901760
        %582 = vmatmul.f32.gmra.mxu0 %v581
        %v583 = vpop.f32.mrf.mxu0
        %v584 = vadd.f32 %v560, %v583
        %585 = vdwg.mxu0
        %586 = vmatpush.xpose.msra.mxu0 0.0
        %587 = vmatpush.xpose.msra.mxu0 0.0
        %588 = vmatpush.xpose.msra.mxu0 0.0
        %589 = vmatpush.xpose.msra.mxu0 0.0
        %590 = vmatpush.xpose.msra.mxu0 0.0
        %591 = vmatpush.xpose.msra.mxu0 0.0
        %592 = vmatpush.xpose.msra.mxu0 0.0
        %593 = vmatpush.xpose.msra.mxu0 0.0
        %594 = vmatpush.xpose.msra.mxu0 0.0
        %595 = vmatpush.xpose.msra.mxu0 0.0
        %596 = vmatpush.xpose.msra.mxu0 0.0
        %597 = vmatpush.xpose.msra.mxu0 0.0
        %598 = vmatpush.xpose.msra.mxu0 0.0
        %599 = vmatpush.xpose.msra.mxu0 0.0
        %600 = vmatpush.xpose.msra.mxu0 0.0
        %v601 = vand.u32 %v484, 4294901760
        %v602 = vsub.f32 %v484, %v601
        %v603 = vand.u32 %v602, 4294901760
        %604 = vmatpush.xpose.msra.mxu0 %v603
        %v605 = vand.u32 %v481, 4294901760
        %606 = vmatmul.f32.gmra.mxu0 %v605
        %v607 = vpop.f32.mrf.mxu0
        %v608 = vadd.f32 %v584, %v607
        %609 = vdwg.mxu0
        %610 = vmatpush.xpose.msra.mxu0 0.0
        %611 = vmatpush.xpose.msra.mxu0 0.0
        %612 = vmatpush.xpose.msra.mxu0 0.0
        %613 = vmatpush.xpose.msra.mxu0 0.0
        %614 = vmatpush.xpose.msra.mxu0 0.0
        %615 = vmatpush.xpose.msra.mxu0 0.0
        %616 = vmatpush.xpose.msra.mxu0 0.0
        %617 = vmatpush.xpose.msra.mxu0 0.0
        %618 = vmatpush.xpose.msra.mxu0 0.0
        %619 = vmatpush.xpose.msra.mxu0 0.0
        %620 = vmatpush.xpose.msra.mxu0 0.0
        %621 = vmatpush.xpose.msra.mxu0 0.0
        %622 = vmatpush.xpose.msra.mxu0 0.0
        %623 = vmatpush.xpose.msra.mxu0 0.0
        %624 = vmatpush.xpose.msra.mxu0 0.0
        %v625 = vand.u32 %v484, 4294901760
        %626 = vmatpush.xpose.msra.mxu0 %v625
        %v627 = vand.u32 %v481, 4294901760
        %628 = vmatmul.f32.gmra.mxu0 %v627
        %v629 = vpop.f32.mrf.mxu0
        %v630 = vadd.f32 %v608, %v629
        %631 = vdwg.mxu0
        %v633 = vsel %vm327, %v317, 0
        %v636 = vsel %vm327, %v321, 0
        %638 = vmatpush.xpose.msra.mxu0 0.0
        %639 = vmatpush.xpose.msra.mxu0 0.0
        %640 = vmatpush.xpose.msra.mxu0 0.0
        %641 = vmatpush.xpose.msra.mxu0 0.0
        %642 = vmatpush.xpose.msra.mxu0 0.0
        %643 = vmatpush.xpose.msra.mxu0 0.0
        %644 = vmatpush.xpose.msra.mxu0 0.0
        %645 = vmatpush.xpose.msra.mxu0 0.0
        %646 = vmatpush.xpose.msra.mxu0 0.0
        %647 = vmatpush.xpose.msra.mxu0 0.0
        %648 = vmatpush.xpose.msra.mxu0 0.0
        %649 = vmatpush.xpose.msra.mxu0 0.0
        %650 = vmatpush.xpose.msra.mxu0 0.0
        %651 = vmatpush.xpose.msra.mxu0 0.0
        %652 = vmatpush.xpose.msra.mxu0 0.0
        %v653 = vand.u32 %v636, 4294901760
        %654 = vmatpush.xpose.msra.mxu0 %v653
        %v655 = vand.u32 %v633, 4294901760
        %v656 = vsub.f32 %v633, %v655
        %v657 = vand.u32 %v656, 4294901760
        %v658 = vsub.f32 %v656, %v657
        %v659 = vand.u32 %v658, 4294901760
        %660 = vmatmul.f32.gmra.mxu0 %v659
        %v661 = vpop.f32.mrf.mxu0
        %v662 = vadd.f32 0.0, %v661
        %663 = vdwg.mxu0
        %664 = vmatpush.xpose.msra.mxu0 0.0
        %665 = vmatpush.xpose.msra.mxu0 0.0
        %666 = vmatpush.xpose.msra.mxu0 0.0
        %667 = vmatpush.xpose.msra.mxu0 0.0
        %668 = vmatpush.xpose.msra.mxu0 0.0
        %669 = vmatpush.xpose.msra.mxu0 0.0
        %670 = vmatpush.xpose.msra.mxu0 0.0
        %671 = vmatpush.xpose.msra.mxu0 0.0
        %672 = vmatpush.xpose.msra.mxu0 0.0
        %673 = vmatpush.xpose.msra.mxu0 0.0
        %674 = vmatpush.xpose.msra.mxu0 0.0
        %675 = vmatpush.xpose.msra.mxu0 0.0
        %676 = vmatpush.xpose.msra.mxu0 0.0
        %677 = vmatpush.xpose.msra.mxu0 0.0
        %678 = vmatpush.xpose.msra.mxu0 0.0
        %v679 = vand.u32 %v636, 4294901760
        %v680 = vsub.f32 %v636, %v679
        %v681 = vand.u32 %v680, 4294901760
        %v682 = vsub.f32 %v680, %v681
        %v683 = vand.u32 %v682, 4294901760
        %684 = vmatpush.xpose.msra.mxu0 %v683
        %v685 = vand.u32 %v633, 4294901760
        %686 = vmatmul.f32.gmra.mxu0 %v685
        %v687 = vpop.f32.mrf.mxu0
        %v688 = vadd.f32 %v662, %v687
        %689 = vdwg.mxu0
        %690 = vmatpush.xpose.msra.mxu0 0.0
        %691 = vmatpush.xpose.msra.mxu0 0.0
        %692 = vmatpush.xpose.msra.mxu0 0.0
        %693 = vmatpush.xpose.msra.mxu0 0.0
        %694 = vmatpush.xpose.msra.mxu0 0.0
        %695 = vmatpush.xpose.msra.mxu0 0.0
        %696 = vmatpush.xpose.msra.mxu0 0.0
        %697 = vmatpush.xpose.msra.mxu0 0.0
        %698 = vmatpush.xpose.msra.mxu0 0.0
        %699 = vmatpush.xpose.msra.mxu0 0.0
        %700 = vmatpush.xpose.msra.mxu0 0.0
        %701 = vmatpush.xpose.msra.mxu0 0.0
        %702 = vmatpush.xpose.msra.mxu0 0.0
        %703 = vmatpush.xpose.msra.mxu0 0.0
        %704 = vmatpush.xpose.msra.mxu0 0.0
        %v705 = vand.u32 %v636, 4294901760
        %v706 = vsub.f32 %v636, %v705
        %707 = vmatpush.xpose.msra.mxu0 %v706
        %v708 = vand.u32 %v633, 4294901760
        %v709 = vsub.f32 %v633, %v708
        %710 = vmatmul.f32.gmra.mxu0 %v709
        %v711 = vpop.f32.mrf.mxu0
        %v712 = vadd.f32 %v688, %v711
        %713 = vdwg.mxu0
        %714 = vmatpush.xpose.msra.mxu0 0.0
        %715 = vmatpush.xpose.msra.mxu0 0.0
        %716 = vmatpush.xpose.msra.mxu0 0.0
        %717 = vmatpush.xpose.msra.mxu0 0.0
        %718 = vmatpush.xpose.msra.mxu0 0.0
        %719 = vmatpush.xpose.msra.mxu0 0.0
        %720 = vmatpush.xpose.msra.mxu0 0.0
        %721 = vmatpush.xpose.msra.mxu0 0.0
        %722 = vmatpush.xpose.msra.mxu0 0.0
        %723 = vmatpush.xpose.msra.mxu0 0.0
        %724 = vmatpush.xpose.msra.mxu0 0.0
        %725 = vmatpush.xpose.msra.mxu0 0.0
        %726 = vmatpush.xpose.msra.mxu0 0.0
        %727 = vmatpush.xpose.msra.mxu0 0.0
        %728 = vmatpush.xpose.msra.mxu0 0.0
        %v729 = vand.u32 %v636, 4294901760
        %730 = vmatpush.xpose.msra.mxu0 %v729
        %v731 = vand.u32 %v633, 4294901760
        %v732 = vsub.f32 %v633, %v731
        %v733 = vand.u32 %v732, 4294901760
        %734 = vmatmul.f32.gmra.mxu0 %v733
        %v735 = vpop.f32.mrf.mxu0
        %v736 = vadd.f32 %v712, %v735
        %737 = vdwg.mxu0
        %738 = vmatpush.xpose.msra.mxu0 0.0
        %739 = vmatpush.xpose.msra.mxu0 0.0
        %740 = vmatpush.xpose.msra.mxu0 0.0
        %741 = vmatpush.xpose.msra.mxu0 0.0
        %742 = vmatpush.xpose.msra.mxu0 0.0
        %743 = vmatpush.xpose.msra.mxu0 0.0
        %744 = vmatpush.xpose.msra.mxu0 0.0
        %745 = vmatpush.xpose.msra.mxu0 0.0
        %746 = vmatpush.xpose.msra.mxu0 0.0
        %747 = vmatpush.xpose.msra.mxu0 0.0
        %748 = vmatpush.xpose.msra.mxu0 0.0
        %749 = vmatpush.xpose.msra.mxu0 0.0
        %750 = vmatpush.xpose.msra.mxu0 0.0
        %751 = vmatpush.xpose.msra.mxu0 0.0
        %752 = vmatpush.xpose.msra.mxu0 0.0
        %v753 = vand.u32 %v636, 4294901760
        %v754 = vsub.f32 %v636, %v753
        %v755 = vand.u32 %v754, 4294901760
        %756 = vmatpush.xpose.msra.mxu0 %v755
        %v757 = vand.u32 %v633, 4294901760
        %758 = vmatmul.f32.gmra.mxu0 %v757
        %v759 = vpop.f32.mrf.mxu0
        %v760 = vadd.f32 %v736, %v759
        %761 = vdwg.mxu0
        %762 = vmatpush.xpose.msra.mxu0 0.0
        %763 = vmatpush.xpose.msra.mxu0 0.0
        %764 = vmatpush.xpose.msra.mxu0 0.0
        %765 = vmatpush.xpose.msra.mxu0 0.0
        %766 = vmatpush.xpose.msra.mxu0 0.0
        %767 = vmatpush.xpose.msra.mxu0 0.0
        %768 = vmatpush.xpose.msra.mxu0 0.0
        %769 = vmatpush.xpose.msra.mxu0 0.0
        %770 = vmatpush.xpose.msra.mxu0 0.0
        %771 = vmatpush.xpose.msra.mxu0 0.0
        %772 = vmatpush.xpose.msra.mxu0 0.0
        %773 = vmatpush.xpose.msra.mxu0 0.0
        %774 = vmatpush.xpose.msra.mxu0 0.0
        %775 = vmatpush.xpose.msra.mxu0 0.0
        %776 = vmatpush.xpose.msra.mxu0 0.0
        %v777 = vand.u32 %v636, 4294901760
        %778 = vmatpush.xpose.msra.mxu0 %v777
        %v779 = vand.u32 %v633, 4294901760
        %780 = vmatmul.f32.gmra.mxu0 %v779
        %v781 = vpop.f32.mrf.mxu0
        %v782 = vadd.f32 %v760, %v781
        %783 = vdwg.mxu0
        %v785 = vsel %vm327, %v318, 0
        %v788 = vsel %vm327, %v322, 0
        %790 = vmatpush.xpose.msra.mxu0 0.0
        %791 = vmatpush.xpose.msra.mxu0 0.0
        %792 = vmatpush.xpose.msra.mxu0 0.0
        %793 = vmatpush.xpose.msra.mxu0 0.0
        %794 = vmatpush.xpose.msra.mxu0 0.0
        %795 = vmatpush.xpose.msra.mxu0 0.0
        %796 = vmatpush.xpose.msra.mxu0 0.0
        %797 = vmatpush.xpose.msra.mxu0 0.0
        %798 = vmatpush.xpose.msra.mxu0 0.0
        %799 = vmatpush.xpose.msra.mxu0 0.0
        %800 = vmatpush.xpose.msra.mxu0 0.0
        %801 = vmatpush.xpose.msra.mxu0 0.0
        %802 = vmatpush.xpose.msra.mxu0 0.0
        %803 = vmatpush.xpose.msra.mxu0 0.0
        %804 = vmatpush.xpose.msra.mxu0 0.0
        %v805 = vand.u32 %v788, 4294901760
        %806 = vmatpush.xpose.msra.mxu0 %v805
        %v807 = vand.u32 %v785, 4294901760
        %v808 = vsub.f32 %v785, %v807
        %v809 = vand.u32 %v808, 4294901760
        %v810 = vsub.f32 %v808, %v809
        %v811 = vand.u32 %v810, 4294901760
        %812 = vmatmul.f32.gmra.mxu0 %v811
        %v813 = vpop.f32.mrf.mxu0
        %v814 = vadd.f32 0.0, %v813
        %815 = vdwg.mxu0
        %816 = vmatpush.xpose.msra.mxu0 0.0
        %817 = vmatpush.xpose.msra.mxu0 0.0
        %818 = vmatpush.xpose.msra.mxu0 0.0
        %819 = vmatpush.xpose.msra.mxu0 0.0
        %820 = vmatpush.xpose.msra.mxu0 0.0
        %821 = vmatpush.xpose.msra.mxu0 0.0
        %822 = vmatpush.xpose.msra.mxu0 0.0
        %823 = vmatpush.xpose.msra.mxu0 0.0
        %824 = vmatpush.xpose.msra.mxu0 0.0
        %825 = vmatpush.xpose.msra.mxu0 0.0
        %826 = vmatpush.xpose.msra.mxu0 0.0
        %827 = vmatpush.xpose.msra.mxu0 0.0
        %828 = vmatpush.xpose.msra.mxu0 0.0
        %829 = vmatpush.xpose.msra.mxu0 0.0
        %830 = vmatpush.xpose.msra.mxu0 0.0
        %v831 = vand.u32 %v788, 4294901760
        %v832 = vsub.f32 %v788, %v831
        %v833 = vand.u32 %v832, 4294901760
        %v834 = vsub.f32 %v832, %v833
        %v835 = vand.u32 %v834, 4294901760
        %836 = vmatpush.xpose.msra.mxu0 %v835
        %v837 = vand.u32 %v785, 4294901760
        %838 = vmatmul.f32.gmra.mxu0 %v837
        %v839 = vpop.f32.mrf.mxu0
        %v840 = vadd.f32 %v814, %v839
        %841 = vdwg.mxu0
        %842 = vmatpush.xpose.msra.mxu0 0.0
        %843 = vmatpush.xpose.msra.mxu0 0.0
        %844 = vmatpush.xpose.msra.mxu0 0.0
        %845 = vmatpush.xpose.msra.mxu0 0.0
        %846 = vmatpush.xpose.msra.mxu0 0.0
        %847 = vmatpush.xpose.msra.mxu0 0.0
        %848 = vmatpush.xpose.msra.mxu0 0.0
        %849 = vmatpush.xpose.msra.mxu0 0.0
        %850 = vmatpush.xpose.msra.mxu0 0.0
        %851 = vmatpush.xpose.msra.mxu0 0.0
        %852 = vmatpush.xpose.msra.mxu0 0.0
        %853 = vmatpush.xpose.msra.mxu0 0.0
        %854 = vmatpush.xpose.msra.mxu0 0.0
        %855 = vmatpush.xpose.msra.mxu0 0.0
        %856 = vmatpush.xpose.msra.mxu0 0.0
        %v857 = vand.u32 %v788, 4294901760
        %v858 = vsub.f32 %v788, %v857
        %859 = vmatpush.xpose.msra.mxu0 %v858
        %v860 = vand.u32 %v785, 4294901760
        %v861 = vsub.f32 %v785, %v860
        %862 = vmatmul.f32.gmra.mxu0 %v861
        %v863 = vpop.f32.mrf.mxu0
        %v864 = vadd.f32 %v840, %v863
        %865 = vdwg.mxu0
        %866 = vmatpush.xpose.msra.mxu0 0.0
        %867 = vmatpush.xpose.msra.mxu0 0.0
        %868 = vmatpush.xpose.msra.mxu0 0.0
        %869 = vmatpush.xpose.msra.mxu0 0.0
        %870 = vmatpush.xpose.msra.mxu0 0.0
        %871 = vmatpush.xpose.msra.mxu0 0.0
        %872 = vmatpush.xpose.msra.mxu0 0.0
        %873 = vmatpush.xpose.msra.mxu0 0.0
        %874 = vmatpush.xpose.msra.mxu0 0.0
        %875 = vmatpush.xpose.msra.mxu0 0.0
        %876 = vmatpush.xpose.msra.mxu0 0.0
        %877 = vmatpush.xpose.msra.mxu0 0.0
        %878 = vmatpush.xpose.msra.mxu0 0.0
        %879 = vmatpush.xpose.msra.mxu0 0.0
        %880 = vmatpush.xpose.msra.mxu0 0.0
        %v881 = vand.u32 %v788, 4294901760
        %882 = vmatpush.xpose.msra.mxu0 %v881
        %v883 = vand.u32 %v785, 4294901760
        %v884 = vsub.f32 %v785, %v883
        %v885 = vand.u32 %v884, 4294901760
        %886 = vmatmul.f32.gmra.mxu0 %v885
        %v887 = vpop.f32.mrf.mxu0
        %v888 = vadd.f32 %v864, %v887
        %889 = vdwg.mxu0
        %890 = vmatpush.xpose.msra.mxu0 0.0
        %891 = vmatpush.xpose.msra.mxu0 0.0
        %892 = vmatpush.xpose.msra.mxu0 0.0
        %893 = vmatpush.xpose.msra.mxu0 0.0
        %894 = vmatpush.xpose.msra.mxu0 0.0
        %895 = vmatpush.xpose.msra.mxu0 0.0
        %896 = vmatpush.xpose.msra.mxu0 0.0
        %897 = vmatpush.xpose.msra.mxu0 0.0
        %898 = vmatpush.xpose.msra.mxu0 0.0
        %899 = vmatpush.xpose.msra.mxu0 0.0
        %900 = vmatpush.xpose.msra.mxu0 0.0
        %901 = vmatpush.xpose.msra.mxu0 0.0
        %902 = vmatpush.xpose.msra.mxu0 0.0
        %903 = vmatpush.xpose.msra.mxu0 0.0
        %904 = vmatpush.xpose.msra.mxu0 0.0
        %v905 = vand.u32 %v788, 4294901760
        %v906 = vsub.f32 %v788, %v905
        %v907 = vand.u32 %v906, 4294901760
        %908 = vmatpush.xpose.msra.mxu0 %v907
        %v909 = vand.u32 %v785, 4294901760
        %910 = vmatmul.f32.gmra.mxu0 %v909
        %v911 = vpop.f32.mrf.mxu0
        %v912 = vadd.f32 %v888, %v911
        %913 = vdwg.mxu0
        %914 = vmatpush.xpose.msra.mxu0 0.0
        %915 = vmatpush.xpose.msra.mxu0 0.0
        %916 = vmatpush.xpose.msra.mxu0 0.0
        %917 = vmatpush.xpose.msra.mxu0 0.0
        %918 = vmatpush.xpose.msra.mxu0 0.0
        %919 = vmatpush.xpose.msra.mxu0 0.0
        %920 = vmatpush.xpose.msra.mxu0 0.0
        %921 = vmatpush.xpose.msra.mxu0 0.0
        %922 = vmatpush.xpose.msra.mxu0 0.0
        %923 = vmatpush.xpose.msra.mxu0 0.0
        %924 = vmatpush.xpose.msra.mxu0 0.0
        %925 = vmatpush.xpose.msra.mxu0 0.0
        %926 = vmatpush.xpose.msra.mxu0 0.0
        %927 = vmatpush.xpose.msra.mxu0 0.0
        %928 = vmatpush.xpose.msra.mxu0 0.0
        %v929 = vand.u32 %v788, 4294901760
        %930 = vmatpush.xpose.msra.mxu0 %v929
        %v931 = vand.u32 %v785, 4294901760
        %932 = vmatmul.f32.gmra.mxu0 %v931
        %v933 = vpop.f32.mrf.mxu0
        %v934 = vadd.f32 %v912, %v933
        %935 = vdwg.mxu0
        %v936 = vmul.f32 %v478, 0.17677669
        %v937 = vmul.f32 %v630, 0.17677669
        %v938 = vmul.f32 %v782, 0.17677669
        %v939 = vmul.f32 %v934, 0.17677669
        %vm940 = vcmask 64512
        %v941 = vsel %vm940, %v936, -inf
        %942 = vmax.xlane.f32.xlu0 %v941
        %v943 = vpop.xlane.xlu0 %942
        %v944 = vsel %vm940, %v937, -inf
        %945 = vmax.xlane.f32.xlu0 %v944
        %v946 = vpop.xlane.xlu0 %945
        %v947 = vsel %vm940, %v938, -inf
        %948 = vmax.xlane.f32.xlu0 %v947
        %v949 = vpop.xlane.xlu0 %948
        %v950 = vsel %vm940, %v939, -inf
        %951 = vmax.xlane.f32.xlu0 %v950
        %v952 = vpop.xlane.xlu0 %951
        %v953 = vsub.f32 %v936, %v943
        %v954 = vsub.f32 %v937, %v946
        %v955 = vsub.f32 %v938, %v949
        %v956 = vsub.f32 %v939, %v952
        %v957 = vmul.f32 %v953, 1.442695
        %v958 = vpow.pop %v957
        %v959 = vmul.f32 %v954, 1.442695
        %v960 = vpow.pop %v959
        %v961 = vmul.f32 %v955, 1.442695
        %v962 = vpow.pop %v961
        %v963 = vmul.f32 %v956, 1.442695
        %v964 = vpow.pop %v963
        %v965 = vsel %vm940, %v958, 0.0
        %966 = vadd.xlane.f32.xlu0 %v965
        %v967 = vpop.xlane.xlu0 %966
        %v968 = vsel %vm940, %v960, 0.0
        %969 = vadd.xlane.f32.xlu0 %v968
        %v970 = vpop.xlane.xlu0 %969
        %v971 = vsel %vm940, %v962, 0.0
        %972 = vadd.xlane.f32.xlu0 %v971
        %v973 = vpop.xlane.xlu0 %972
        %v974 = vsel %vm940, %v964, 0.0
        %975 = vadd.xlane.f32.xlu0 %v974
        %v976 = vpop.xlane.xlu0 %975
        %v977 = vrcp.pop %v967
        %v978 = vmul.f32 %v967, %v977
        %v979 = vsub.f32 1.0, %v978
        %v980 = vmul.f32 %v977, %v979
        %v981 = vadd.f32 %v977, %v980
        %vm982 = vweird.f32 %v967
        %vm983 = vweird.f32 %v977
        %vm984 = vmor %vm982, %vm983
        %v985 = vsel %vm984, %v977, %v981
        %v986 = vand.u32 2147483647, %v967
        %vm987 = vcmp.eq.f32.partialorder %v986, 8.507059e+37
        %v988 = vand.u32 %v967, 2147483648
        %v989 = vor.u32 1.1754944e-38, %v988
        %v990 = vsel %vm987, %v989, %v985
        %v991 = vmul.f32 %v958, %v990
        %v992 = vrcp.pop %v970
        %v993 = vmul.f32 %v970, %v992
        %v994 = vsub.f32 1.0, %v993
        %v995 = vmul.f32 %v992, %v994
        %v996 = vadd.f32 %v992, %v995
        %vm997 = vweird.f32 %v970
        %vm998 = vweird.f32 %v992
        %vm999 = vmor %vm997, %vm998
        %v1000 = vsel %vm999, %v992, %v996
        %v1001 = vand.u32 2147483647, %v970
        %vm1002 = vcmp.eq.f32.partialorder %v1001, 8.507059e+37
        %v1003 = vand.u32 %v970, 2147483648
        %v1004 = vor.u32 1.1754944e-38, %v1003
        %v1005 = vsel %vm1002, %v1004, %v1000
        %v1006 = vmul.f32 %v960, %v1005
        %v1007 = vrcp.pop %v973
        %v1008 = vmul.f32 %v973, %v1007
        %v1009 = vsub.f32 1.0, %v1008
        %v1010 = vmul.f32 %v1007, %v1009
        %v1011 = vadd.f32 %v1007, %v1010
        %vm1012 = vweird.f32 %v973
        %vm1013 = vweird.f32 %v1007
        %vm1014 = vmor %vm1012, %vm1013
        %v1015 = vsel %vm1014, %v1007, %v1011
        %v1016 = vand.u32 2147483647, %v973
        %vm1017 = vcmp.eq.f32.partialorder %v1016, 8.507059e+37
        %v1018 = vand.u32 %v973, 2147483648
        %v1019 = vor.u32 1.1754944e-38, %v1018
        %v1020 = vsel %vm1017, %v1019, %v1015
        %v1021 = vmul.f32 %v962, %v1020
        %v1022 = vrcp.pop %v976
        %v1023 = vmul.f32 %v976, %v1022
        %v1024 = vsub.f32 1.0, %v1023
        %v1025 = vmul.f32 %v1022, %v1024
        %v1026 = vadd.f32 %v1022, %v1025
        %vm1027 = vweird.f32 %v976
        %vm1028 = vweird.f32 %v1022
        %vm1029 = vmor %vm1027, %vm1028
        %v1030 = vsel %vm1029, %v1022, %v1026
        %v1031 = vand.u32 2147483647, %v976
        %vm1032 = vcmp.eq.f32.partialorder %v1031, 8.507059e+37
        %v1033 = vand.u32 %v976, 2147483648
        %v1034 = vor.u32 1.1754944e-38, %v1033
        %v1035 = vsel %vm1032, %v1034, %v1030
        %v1036 = vmul.f32 %v964, %v1035
        %v1038 = vsel %vm940, %v991, 0
        %1040 = vmatpush.msra.mxu0 0.0
        %1041 = vmatpush.msra.mxu0 0.0
        %1042 = vmatpush.msra.mxu0 0.0
        %1043 = vmatpush.msra.mxu0 0.0
        %1044 = vmatpush.msra.mxu0 0.0
        %1045 = vmatpush.msra.mxu0 0.0
        %1046 = vmatpush.msra.mxu0 0.0
        %1047 = vmatpush.msra.mxu0 0.0
        %1048 = vmatpush.msra.mxu0 0.0
        %1049 = vmatpush.msra.mxu0 0.0
        %1050 = vmatpush.msra.mxu0 0.0
        %1051 = vmatpush.msra.mxu0 0.0
        %1052 = vmatpush.msra.mxu0 0.0
        %1053 = vmatpush.msra.mxu0 0.0
        %1054 = vmatpush.msra.mxu0 0.0
        %v1055 = vand.u32 %v323, 4294901760
        %1056 = vmatpush.msra.mxu0 %v1055
        %v1057 = vand.u32 %v1038, 4294901760
        %v1058 = vsub.f32 %v1038, %v1057
        %v1059 = vand.u32 %v1058, 4294901760
        %v1060 = vsub.f32 %v1058, %v1059
        %v1061 = vand.u32 %v1060, 4294901760
        %1062 = vmatmul.f32.gmra.mxu0 %v1061
        %v1063 = vpop.f32.mrf.mxu0
        %v1064 = vadd.f32 0.0, %v1063
        %1065 = vdwg.mxu0
        %1066 = vmatpush.msra.mxu0 0.0
        %1067 = vmatpush.msra.mxu0 0.0
        %1068 = vmatpush.msra.mxu0 0.0
        %1069 = vmatpush.msra.mxu0 0.0
        %1070 = vmatpush.msra.mxu0 0.0
        %1071 = vmatpush.msra.mxu0 0.0
        %1072 = vmatpush.msra.mxu0 0.0
        %1073 = vmatpush.msra.mxu0 0.0
        %1074 = vmatpush.msra.mxu0 0.0
        %1075 = vmatpush.msra.mxu0 0.0
        %1076 = vmatpush.msra.mxu0 0.0
        %1077 = vmatpush.msra.mxu0 0.0
        %1078 = vmatpush.msra.mxu0 0.0
        %1079 = vmatpush.msra.mxu0 0.0
        %1080 = vmatpush.msra.mxu0 0.0
        %v1081 = vand.u32 %v323, 4294901760
        %v1082 = vsub.f32 %v323, %v1081
        %v1083 = vand.u32 %v1082, 4294901760
        %v1084 = vsub.f32 %v1082, %v1083
        %v1085 = vand.u32 %v1084, 4294901760
        %1086 = vmatpush.msra.mxu0 %v1085
        %v1087 = vand.u32 %v1038, 4294901760
        %1088 = vmatmul.f32.gmra.mxu0 %v1087
        %v1089 = vpop.f32.mrf.mxu0
        %v1090 = vadd.f32 %v1064, %v1089
        %1091 = vdwg.mxu0
        %1092 = vmatpush.msra.mxu0 0.0
        %1093 = vmatpush.msra.mxu0 0.0
        %1094 = vmatpush.msra.mxu0 0.0
        %1095 = vmatpush.msra.mxu0 0.0
        %1096 = vmatpush.msra.mxu0 0.0
        %1097 = vmatpush.msra.mxu0 0.0
        %1098 = vmatpush.msra.mxu0 0.0
        %1099 = vmatpush.msra.mxu0 0.0
        %1100 = vmatpush.msra.mxu0 0.0
        %1101 = vmatpush.msra.mxu0 0.0
        %1102 = vmatpush.msra.mxu0 0.0
        %1103 = vmatpush.msra.mxu0 0.0
        %1104 = vmatpush.msra.mxu0 0.0
        %1105 = vmatpush.msra.mxu0 0.0
        %1106 = vmatpush.msra.mxu0 0.0
        %v1107 = vand.u32 %v323, 4294901760
        %v1108 = vsub.f32 %v323, %v1107
        %1109 = vmatpush.msra.mxu0 %v1108
        %v1110 = vand.u32 %v1038, 4294901760
        %v1111 = vsub.f32 %v1038, %v1110
        %1112 = vmatmul.f32.gmra.mxu0 %v1111
        %v1113 = vpop.f32.mrf.mxu0
        %v1114 = vadd.f32 %v1090, %v1113
        %1115 = vdwg.mxu0
        %1116 = vmatpush.msra.mxu0 0.0
        %1117 = vmatpush.msra.mxu0 0.0
        %1118 = vmatpush.msra.mxu0 0.0
        %1119 = vmatpush.msra.mxu0 0.0
        %1120 = vmatpush.msra.mxu0 0.0
        %1121 = vmatpush.msra.mxu0 0.0
        %1122 = vmatpush.msra.mxu0 0.0
        %1123 = vmatpush.msra.mxu0 0.0
        %1124 = vmatpush.msra.mxu0 0.0
        %1125 = vmatpush.msra.mxu0 0.0
        %1126 = vmatpush.msra.mxu0 0.0
        %1127 = vmatpush.msra.mxu0 0.0
        %1128 = vmatpush.msra.mxu0 0.0
        %1129 = vmatpush.msra.mxu0 0.0
        %1130 = vmatpush.msra.mxu0 0.0
        %v1131 = vand.u32 %v323, 4294901760
        %1132 = vmatpush.msra.mxu0 %v1131
        %v1133 = vand.u32 %v1038, 4294901760
        %v1134 = vsub.f32 %v1038, %v1133
        %v1135 = vand.u32 %v1134, 4294901760
        %1136 = vmatmul.f32.gmra.mxu0 %v1135
        %v1137 = vpop.f32.mrf.mxu0
        %v1138 = vadd.f32 %v1114, %v1137
        %1139 = vdwg.mxu0
        %1140 = vmatpush.msra.mxu0 0.0
        %1141 = vmatpush.msra.mxu0 0.0
        %1142 = vmatpush.msra.mxu0 0.0
        %1143 = vmatpush.msra.mxu0 0.0
        %1144 = vmatpush.msra.mxu0 0.0
        %1145 = vmatpush.msra.mxu0 0.0
        %1146 = vmatpush.msra.mxu0 0.0
        %1147 = vmatpush.msra.mxu0 0.0
        %1148 = vmatpush.msra.mxu0 0.0
        %1149 = vmatpush.msra.mxu0 0.0
        %1150 = vmatpush.msra.mxu0 0.0
        %1151 = vmatpush.msra.mxu0 0.0
        %1152 = vmatpush.msra.mxu0 0.0
        %1153 = vmatpush.msra.mxu0 0.0
        %1154 = vmatpush.msra.mxu0 0.0
        %v1155 = vand.u32 %v323, 4294901760
        %v1156 = vsub.f32 %v323, %v1155
        %v1157 = vand.u32 %v1156, 4294901760
        %1158 = vmatpush.msra.mxu0 %v1157
        %v1159 = vand.u32 %v1038, 4294901760
        %1160 = vmatmul.f32.gmra.mxu0 %v1159
        %v1161 = vpop.f32.mrf.mxu0
        %v1162 = vadd.f32 %v1138, %v1161
        %1163 = vdwg.mxu0
        %1164 = vmatpush.msra.mxu0 0.0
        %1165 = vmatpush.msra.mxu0 0.0
        %1166 = vmatpush.msra.mxu0 0.0
        %1167 = vmatpush.msra.mxu0 0.0
        %1168 = vmatpush.msra.mxu0 0.0
        %1169 = vmatpush.msra.mxu0 0.0
        %1170 = vmatpush.msra.mxu0 0.0
        %1171 = vmatpush.msra.mxu0 0.0
        %1172 = vmatpush.msra.mxu0 0.0
        %1173 = vmatpush.msra.mxu0 0.0
        %1174 = vmatpush.msra.mxu0 0.0
        %1175 = vmatpush.msra.mxu0 0.0
        %1176 = vmatpush.msra.mxu0 0.0
        %1177 = vmatpush.msra.mxu0 0.0
        %1178 = vmatpush.msra.mxu0 0.0
        %v1179 = vand.u32 %v323, 4294901760
        %1180 = vmatpush.msra.mxu0 %v1179
        %v1181 = vand.u32 %v1038, 4294901760
        %1182 = vmatmul.f32.gmra.mxu0 %v1181
        %v1183 = vpop.f32.mrf.mxu0
        %v1184 = vadd.f32 %v1162, %v1183
        %1185 = vdwg.mxu0
        %v1187 = vsel %vm940, %v1006, 0
        %1189 = vmatpush.msra.mxu0 0.0
        %1190 = vmatpush.msra.mxu0 0.0
        %1191 = vmatpush.msra.mxu0 0.0
        %1192 = vmatpush.msra.mxu0 0.0
        %1193 = vmatpush.msra.mxu0 0.0
        %1194 = vmatpush.msra.mxu0 0.0
        %1195 = vmatpush.msra.mxu0 0.0
        %1196 = vmatpush.msra.mxu0 0.0
        %1197 = vmatpush.msra.mxu0 0.0
        %1198 = vmatpush.msra.mxu0 0.0
        %1199 = vmatpush.msra.mxu0 0.0
        %1200 = vmatpush.msra.mxu0 0.0
        %1201 = vmatpush.msra.mxu0 0.0
        %1202 = vmatpush.msra.mxu0 0.0
        %1203 = vmatpush.msra.mxu0 0.0
        %v1204 = vand.u32 %v324, 4294901760
        %1205 = vmatpush.msra.mxu0 %v1204
        %v1206 = vand.u32 %v1187, 4294901760
        %v1207 = vsub.f32 %v1187, %v1206
        %v1208 = vand.u32 %v1207, 4294901760
        %v1209 = vsub.f32 %v1207, %v1208
        %v1210 = vand.u32 %v1209, 4294901760
        %1211 = vmatmul.f32.gmra.mxu0 %v1210
        %v1212 = vpop.f32.mrf.mxu0
        %v1213 = vadd.f32 0.0, %v1212
        %1214 = vdwg.mxu0
        %1215 = vmatpush.msra.mxu0 0.0
        %1216 = vmatpush.msra.mxu0 0.0
        %1217 = vmatpush.msra.mxu0 0.0
        %1218 = vmatpush.msra.mxu0 0.0
        %1219 = vmatpush.msra.mxu0 0.0
        %1220 = vmatpush.msra.mxu0 0.0
        %1221 = vmatpush.msra.mxu0 0.0
        %1222 = vmatpush.msra.mxu0 0.0
        %1223 = vmatpush.msra.mxu0 0.0
        %1224 = vmatpush.msra.mxu0 0.0
        %1225 = vmatpush.msra.mxu0 0.0
        %1226 = vmatpush.msra.mxu0 0.0
        %1227 = vmatpush.msra.mxu0 0.0
        %1228 = vmatpush.msra.mxu0 0.0
        %1229 = vmatpush.msra.mxu0 0.0
        %v1230 = vand.u32 %v324, 4294901760
        %v1231 = vsub.f32 %v324, %v1230
        %v1232 = vand.u32 %v1231, 4294901760
        %v1233 = vsub.f32 %v1231, %v1232
        %v1234 = vand.u32 %v1233, 4294901760
        %1235 = vmatpush.msra.mxu0 %v1234
        %v1236 = vand.u32 %v1187, 4294901760
        %1237 = vmatmul.f32.gmra.mxu0 %v1236
        %v1238 = vpop.f32.mrf.mxu0
        %v1239 = vadd.f32 %v1213, %v1238
        %1240 = vdwg.mxu0
        %1241 = vmatpush.msra.mxu0 0.0
        %1242 = vmatpush.msra.mxu0 0.0
        %1243 = vmatpush.msra.mxu0 0.0
        %1244 = vmatpush.msra.mxu0 0.0
        %1245 = vmatpush.msra.mxu0 0.0
        %1246 = vmatpush.msra.mxu0 0.0
        %1247 = vmatpush.msra.mxu0 0.0
        %1248 = vmatpush.msra.mxu0 0.0
        %1249 = vmatpush.msra.mxu0 0.0
        %1250 = vmatpush.msra.mxu0 0.0
        %1251 = vmatpush.msra.mxu0 0.0
        %1252 = vmatpush.msra.mxu0 0.0
        %1253 = vmatpush.msra.mxu0 0.0
        %1254 = vmatpush.msra.mxu0 0.0
        %1255 = vmatpush.msra.mxu0 0.0
        %v1256 = vand.u32 %v324, 4294901760
        %v1257 = vsub.f32 %v324, %v1256
        %1258 = vmatpush.msra.mxu0 %v1257
        %v1259 = vand.u32 %v1187, 4294901760
        %v1260 = vsub.f32 %v1187, %v1259
        %1261 = vmatmul.f32.gmra.mxu0 %v1260
        %v1262 = vpop.f32.mrf.mxu0
        %v1263 = vadd.f32 %v1239, %v1262
        %1264 = vdwg.mxu0
        %1265 = vmatpush.msra.mxu0 0.0
        %1266 = vmatpush.msra.mxu0 0.0
        %1267 = vmatpush.msra.mxu0 0.0
        %1268 = vmatpush.msra.mxu0 0.0
        %1269 = vmatpush.msra.mxu0 0.0
        %1270 = vmatpush.msra.mxu0 0.0
        %1271 = vmatpush.msra.mxu0 0.0
        %1272 = vmatpush.msra.mxu0 0.0
        %1273 = vmatpush.msra.mxu0 0.0
        %1274 = vmatpush.msra.mxu0 0.0
        %1275 = vmatpush.msra.mxu0 0.0
        %1276 = vmatpush.msra.mxu0 0.0
        %1277 = vmatpush.msra.mxu0 0.0
        %1278 = vmatpush.msra.mxu0 0.0
        %1279 = vmatpush.msra.mxu0 0.0
        %v1280 = vand.u32 %v324, 4294901760
        %1281 = vmatpush.msra.mxu0 %v1280
        %v1282 = vand.u32 %v1187, 4294901760
        %v1283 = vsub.f32 %v1187, %v1282
        %v1284 = vand.u32 %v1283, 4294901760
        %1285 = vmatmul.f32.gmra.mxu0 %v1284
        %v1286 = vpop.f32.mrf.mxu0
        %v1287 = vadd.f32 %v1263, %v1286
        %1288 = vdwg.mxu0
        %1289 = vmatpush.msra.mxu0 0.0
        %1290 = vmatpush.msra.mxu0 0.0
        %1291 = vmatpush.msra.mxu0 0.0
        %1292 = vmatpush.msra.mxu0 0.0
        %1293 = vmatpush.msra.mxu0 0.0
        %1294 = vmatpush.msra.mxu0 0.0
        %1295 = vmatpush.msra.mxu0 0.0
        %1296 = vmatpush.msra.mxu0 0.0
        %1297 = vmatpush.msra.mxu0 0.0
        %1298 = vmatpush.msra.mxu0 0.0
        %1299 = vmatpush.msra.mxu0 0.0
        %1300 = vmatpush.msra.mxu0 0.0
        %1301 = vmatpush.msra.mxu0 0.0
        %1302 = vmatpush.msra.mxu0 0.0
        %1303 = vmatpush.msra.mxu0 0.0
        %v1304 = vand.u32 %v324, 4294901760
        %v1305 = vsub.f32 %v324, %v1304
        %v1306 = vand.u32 %v1305, 4294901760
        %1307 = vmatpush.msra.mxu0 %v1306
        %v1308 = vand.u32 %v1187, 4294901760
        %1309 = vmatmul.f32.gmra.mxu0 %v1308
        %v1310 = vpop.f32.mrf.mxu0
        %v1311 = vadd.f32 %v1287, %v1310
        %1312 = vdwg.mxu0
        %1313 = vmatpush.msra.mxu0 0.0
        %1314 = vmatpush.msra.mxu0 0.0
        %1315 = vmatpush.msra.mxu0 0.0
        %1316 = vmatpush.msra.mxu0 0.0
        %1317 = vmatpush.msra.mxu0 0.0
        %1318 = vmatpush.msra.mxu0 0.0
        %1319 = vmatpush.msra.mxu0 0.0
        %1320 = vmatpush.msra.mxu0 0.0
        %1321 = vmatpush.msra.mxu0 0.0
        %1322 = vmatpush.msra.mxu0 0.0
        %1323 = vmatpush.msra.mxu0 0.0
        %1324 = vmatpush.msra.mxu0 0.0
        %1325 = vmatpush.msra.mxu0 0.0
        %1326 = vmatpush.msra.mxu0 0.0
        %1327 = vmatpush.msra.mxu0 0.0
        %v1328 = vand.u32 %v324, 4294901760
        %1329 = vmatpush.msra.mxu0 %v1328
        %v1330 = vand.u32 %v1187, 4294901760
        %1331 = vmatmul.f32.gmra.mxu0 %v1330
        %v1332 = vpop.f32.mrf.mxu0
        %v1333 = vadd.f32 %v1311, %v1332
        %1334 = vdwg.mxu0
        %v1336 = vsel %vm940, %v1021, 0
        %1338 = vmatpush.msra.mxu0 0.0
        %1339 = vmatpush.msra.mxu0 0.0
        %1340 = vmatpush.msra.mxu0 0.0
        %1341 = vmatpush.msra.mxu0 0.0
        %1342 = vmatpush.msra.mxu0 0.0
        %1343 = vmatpush.msra.mxu0 0.0
        %1344 = vmatpush.msra.mxu0 0.0
        %1345 = vmatpush.msra.mxu0 0.0
        %1346 = vmatpush.msra.mxu0 0.0
        %1347 = vmatpush.msra.mxu0 0.0
        %1348 = vmatpush.msra.mxu0 0.0
        %1349 = vmatpush.msra.mxu0 0.0
        %1350 = vmatpush.msra.mxu0 0.0
        %1351 = vmatpush.msra.mxu0 0.0
        %1352 = vmatpush.msra.mxu0 0.0
        %v1353 = vand.u32 %v325, 4294901760
        %1354 = vmatpush.msra.mxu0 %v1353
        %v1355 = vand.u32 %v1336, 4294901760
        %v1356 = vsub.f32 %v1336, %v1355
        %v1357 = vand.u32 %v1356, 4294901760
        %v1358 = vsub.f32 %v1356, %v1357
        %v1359 = vand.u32 %v1358, 4294901760
        %1360 = vmatmul.f32.gmra.mxu0 %v1359
        %v1361 = vpop.f32.mrf.mxu0
        %v1362 = vadd.f32 0.0, %v1361
        %1363 = vdwg.mxu0
        %1364 = vmatpush.msra.mxu0 0.0
        %1365 = vmatpush.msra.mxu0 0.0
        %1366 = vmatpush.msra.mxu0 0.0
        %1367 = vmatpush.msra.mxu0 0.0
        %1368 = vmatpush.msra.mxu0 0.0
        %1369 = vmatpush.msra.mxu0 0.0
        %1370 = vmatpush.msra.mxu0 0.0
        %1371 = vmatpush.msra.mxu0 0.0
        %1372 = vmatpush.msra.mxu0 0.0
        %1373 = vmatpush.msra.mxu0 0.0
        %1374 = vmatpush.msra.mxu0 0.0
        %1375 = vmatpush.msra.mxu0 0.0
        %1376 = vmatpush.msra.mxu0 0.0
        %1377 = vmatpush.msra.mxu0 0.0
        %1378 = vmatpush.msra.mxu0 0.0
        %v1379 = vand.u32 %v325, 4294901760
        %v1380 = vsub.f32 %v325, %v1379
        %v1381 = vand.u32 %v1380, 4294901760
        %v1382 = vsub.f32 %v1380, %v1381
        %v1383 = vand.u32 %v1382, 4294901760
        %1384 = vmatpush.msra.mxu0 %v1383
        %v1385 = vand.u32 %v1336, 4294901760
        %1386 = vmatmul.f32.gmra.mxu0 %v1385
        %v1387 = vpop.f32.mrf.mxu0
        %v1388 = vadd.f32 %v1362, %v1387
        %1389 = vdwg.mxu0
        %1390 = vmatpush.msra.mxu0 0.0
        %1391 = vmatpush.msra.mxu0 0.0
        %1392 = vmatpush.msra.mxu0 0.0
        %1393 = vmatpush.msra.mxu0 0.0
        %1394 = vmatpush.msra.mxu0 0.0
        %1395 = vmatpush.msra.mxu0 0.0
        %1396 = vmatpush.msra.mxu0 0.0
        %1397 = vmatpush.msra.mxu0 0.0
        %1398 = vmatpush.msra.mxu0 0.0
        %1399 = vmatpush.msra.mxu0 0.0
        %1400 = vmatpush.msra.mxu0 0.0
        %1401 = vmatpush.msra.mxu0 0.0
        %1402 = vmatpush.msra.mxu0 0.0
        %1403 = vmatpush.msra.mxu0 0.0
        %1404 = vmatpush.msra.mxu0 0.0
        %v1405 = vand.u32 %v325, 4294901760
        %v1406 = vsub.f32 %v325, %v1405
        %1407 = vmatpush.msra.mxu0 %v1406
        %v1408 = vand.u32 %v1336, 4294901760
        %v1409 = vsub.f32 %v1336, %v1408
        %1410 = vmatmul.f32.gmra.mxu0 %v1409
        %v1411 = vpop.f32.mrf.mxu0
        %v1412 = vadd.f32 %v1388, %v1411
        %1413 = vdwg.mxu0
        %1414 = vmatpush.msra.mxu0 0.0
        %1415 = vmatpush.msra.mxu0 0.0
        %1416 = vmatpush.msra.mxu0 0.0
        %1417 = vmatpush.msra.mxu0 0.0
        %1418 = vmatpush.msra.mxu0 0.0
        %1419 = vmatpush.msra.mxu0 0.0
        %1420 = vmatpush.msra.mxu0 0.0
        %1421 = vmatpush.msra.mxu0 0.0
        %1422 = vmatpush.msra.mxu0 0.0
        %1423 = vmatpush.msra.mxu0 0.0
        %1424 = vmatpush.msra.mxu0 0.0
        %1425 = vmatpush.msra.mxu0 0.0
        %1426 = vmatpush.msra.mxu0 0.0
        %1427 = vmatpush.msra.mxu0 0.0
        %1428 = vmatpush.msra.mxu0 0.0
        %v1429 = vand.u32 %v325, 4294901760
        %1430 = vmatpush.msra.mxu0 %v1429
        %v1431 = vand.u32 %v1336, 4294901760
        %v1432 = vsub.f32 %v1336, %v1431
        %v1433 = vand.u32 %v1432, 4294901760
        %1434 = vmatmul.f32.gmra.mxu0 %v1433
        %v1435 = vpop.f32.mrf.mxu0
        %v1436 = vadd.f32 %v1412, %v1435
        %1437 = vdwg.mxu0
        %1438 = vmatpush.msra.mxu0 0.0
        %1439 = vmatpush.msra.mxu0 0.0
        %1440 = vmatpush.msra.mxu0 0.0
        %1441 = vmatpush.msra.mxu0 0.0
        %1442 = vmatpush.msra.mxu0 0.0
        %1443 = vmatpush.msra.mxu0 0.0
        %1444 = vmatpush.msra.mxu0 0.0
        %1445 = vmatpush.msra.mxu0 0.0
        %1446 = vmatpush.msra.mxu0 0.0
        %1447 = vmatpush.msra.mxu0 0.0
        %1448 = vmatpush.msra.mxu0 0.0
        %1449 = vmatpush.msra.mxu0 0.0
        %1450 = vmatpush.msra.mxu0 0.0
        %1451 = vmatpush.msra.mxu0 0.0
        %1452 = vmatpush.msra.mxu0 0.0
        %v1453 = vand.u32 %v325, 4294901760
        %v1454 = vsub.f32 %v325, %v1453
        %v1455 = vand.u32 %v1454, 4294901760
        %1456 = vmatpush.msra.mxu0 %v1455
        %v1457 = vand.u32 %v1336, 4294901760
        %1458 = vmatmul.f32.gmra.mxu0 %v1457
        %v1459 = vpop.f32.mrf.mxu0
        %v1460 = vadd.f32 %v1436, %v1459
        %1461 = vdwg.mxu0
        %1462 = vmatpush.msra.mxu0 0.0
        %1463 = vmatpush.msra.mxu0 0.0
        %1464 = vmatpush.msra.mxu0 0.0
        %1465 = vmatpush.msra.mxu0 0.0
        %1466 = vmatpush.msra.mxu0 0.0
        %1467 = vmatpush.msra.mxu0 0.0
        %1468 = vmatpush.msra.mxu0 0.0
        %1469 = vmatpush.msra.mxu0 0.0
        %1470 = vmatpush.msra.mxu0 0.0
        %1471 = vmatpush.msra.mxu0 0.0
        %1472 = vmatpush.msra.mxu0 0.0
        %1473 = vmatpush.msra.mxu0 0.0
        %1474 = vmatpush.msra.mxu0 0.0
        %1475 = vmatpush.msra.mxu0 0.0
        %1476 = vmatpush.msra.mxu0 0.0
        %v1477 = vand.u32 %v325, 4294901760
        %1478 = vmatpush.msra.mxu0 %v1477
        %v1479 = vand.u32 %v1336, 4294901760
        %1480 = vmatmul.f32.gmra.mxu0 %v1479
        %v1481 = vpop.f32.mrf.mxu0
        %v1482 = vadd.f32 %v1460, %v1481
        %1483 = vdwg.mxu0
        %v1485 = vsel %vm940, %v1036, 0
        %1487 = vmatpush.msra.mxu0 0.0
        %1488 = vmatpush.msra.mxu0 0.0
        %1489 = vmatpush.msra.mxu0 0.0
        %1490 = vmatpush.msra.mxu0 0.0
        %1491 = vmatpush.msra.mxu0 0.0
        %1492 = vmatpush.msra.mxu0 0.0
        %1493 = vmatpush.msra.mxu0 0.0
        %1494 = vmatpush.msra.mxu0 0.0
        %1495 = vmatpush.msra.mxu0 0.0
        %1496 = vmatpush.msra.mxu0 0.0
        %1497 = vmatpush.msra.mxu0 0.0
        %1498 = vmatpush.msra.mxu0 0.0
        %1499 = vmatpush.msra.mxu0 0.0
        %1500 = vmatpush.msra.mxu0 0.0
        %1501 = vmatpush.msra.mxu0 0.0
        %v1502 = vand.u32 %v326, 4294901760
        %1503 = vmatpush.msra.mxu0 %v1502
        %v1504 = vand.u32 %v1485, 4294901760
        %v1505 = vsub.f32 %v1485, %v1504
        %v1506 = vand.u32 %v1505, 4294901760
        %v1507 = vsub.f32 %v1505, %v1506
        %v1508 = vand.u32 %v1507, 4294901760
        %1509 = vmatmul.f32.gmra.mxu0 %v1508
        %v1510 = vpop.f32.mrf.mxu0
        %v1511 = vadd.f32 0.0, %v1510
        %1512 = vdwg.mxu0
        %1513 = vmatpush.msra.mxu0 0.0
        %1514 = vmatpush.msra.mxu0 0.0
        %1515 = vmatpush.msra.mxu0 0.0
        %1516 = vmatpush.msra.mxu0 0.0
        %1517 = vmatpush.msra.mxu0 0.0
        %1518 = vmatpush.msra.mxu0 0.0
        %1519 = vmatpush.msra.mxu0 0.0
        %1520 = vmatpush.msra.mxu0 0.0
        %1521 = vmatpush.msra.mxu0 0.0
        %1522 = vmatpush.msra.mxu0 0.0
        %1523 = vmatpush.msra.mxu0 0.0
        %1524 = vmatpush.msra.mxu0 0.0
        %1525 = vmatpush.msra.mxu0 0.0
        %1526 = vmatpush.msra.mxu0 0.0
        %1527 = vmatpush.msra.mxu0 0.0
        %v1528 = vand.u32 %v326, 4294901760
        %v1529 = vsub.f32 %v326, %v1528
        %v1530 = vand.u32 %v1529, 4294901760
        %v1531 = vsub.f32 %v1529, %v1530
        %v1532 = vand.u32 %v1531, 4294901760
        %1533 = vmatpush.msra.mxu0 %v1532
        %v1534 = vand.u32 %v1485, 4294901760
        %1535 = vmatmul.f32.gmra.mxu0 %v1534
        %v1536 = vpop.f32.mrf.mxu0
        %v1537 = vadd.f32 %v1511, %v1536
        %1538 = vdwg.mxu0
        %1539 = vmatpush.msra.mxu0 0.0
        %1540 = vmatpush.msra.mxu0 0.0
        %1541 = vmatpush.msra.mxu0 0.0
        %1542 = vmatpush.msra.mxu0 0.0
        %1543 = vmatpush.msra.mxu0 0.0
        %1544 = vmatpush.msra.mxu0 0.0
        %1545 = vmatpush.msra.mxu0 0.0
        %1546 = vmatpush.msra.mxu0 0.0
        %1547 = vmatpush.msra.mxu0 0.0
        %1548 = vmatpush.msra.mxu0 0.0
        %1549 = vmatpush.msra.mxu0 0.0
        %1550 = vmatpush.msra.mxu0 0.0
        %1551 = vmatpush.msra.mxu0 0.0
        %1552 = vmatpush.msra.mxu0 0.0
        %1553 = vmatpush.msra.mxu0 0.0
        %v1554 = vand.u32 %v326, 4294901760
        %v1555 = vsub.f32 %v326, %v1554
        %1556 = vmatpush.msra.mxu0 %v1555
        %v1557 = vand.u32 %v1485, 4294901760
        %v1558 = vsub.f32 %v1485, %v1557
        %1559 = vmatmul.f32.gmra.mxu0 %v1558
        %v1560 = vpop.f32.mrf.mxu0
        %v1561 = vadd.f32 %v1537, %v1560
        %1562 = vdwg.mxu0
        %1563 = vmatpush.msra.mxu0 0.0
        %1564 = vmatpush.msra.mxu0 0.0
        %1565 = vmatpush.msra.mxu0 0.0
        %1566 = vmatpush.msra.mxu0 0.0
        %1567 = vmatpush.msra.mxu0 0.0
        %1568 = vmatpush.msra.mxu0 0.0
        %1569 = vmatpush.msra.mxu0 0.0
        %1570 = vmatpush.msra.mxu0 0.0
        %1571 = vmatpush.msra.mxu0 0.0
        %1572 = vmatpush.msra.mxu0 0.0
        %1573 = vmatpush.msra.mxu0 0.0
        %1574 = vmatpush.msra.mxu0 0.0
        %1575 = vmatpush.msra.mxu0 0.0
        %1576 = vmatpush.msra.mxu0 0.0
        %1577 = vmatpush.msra.mxu0 0.0
        %v1578 = vand.u32 %v326, 4294901760
        %1579 = vmatpush.msra.mxu0 %v1578
        %v1580 = vand.u32 %v1485, 4294901760
        %v1581 = vsub.f32 %v1485, %v1580
        %v1582 = vand.u32 %v1581, 4294901760
        %1583 = vmatmul.f32.gmra.mxu0 %v1582
        %v1584 = vpop.f32.mrf.mxu0
        %v1585 = vadd.f32 %v1561, %v1584
        %1586 = vdwg.mxu0
        %1587 = vmatpush.msra.mxu0 0.0
        %1588 = vmatpush.msra.mxu0 0.0
        %1589 = vmatpush.msra.mxu0 0.0
        %1590 = vmatpush.msra.mxu0 0.0
        %1591 = vmatpush.msra.mxu0 0.0
        %1592 = vmatpush.msra.mxu0 0.0
        %1593 = vmatpush.msra.mxu0 0.0
        %1594 = vmatpush.msra.mxu0 0.0
        %1595 = vmatpush.msra.mxu0 0.0
        %1596 = vmatpush.msra.mxu0 0.0
        %1597 = vmatpush.msra.mxu0 0.0
        %1598 = vmatpush.msra.mxu0 0.0
        %1599 = vmatpush.msra.mxu0 0.0
        %1600 = vmatpush.msra.mxu0 0.0
        %1601 = vmatpush.msra.mxu0 0.0
        %v1602 = vand.u32 %v326, 4294901760
        %v1603 = vsub.f32 %v326, %v1602
        %v1604 = vand.u32 %v1603, 4294901760
        %1605 = vmatpush.msra.mxu0 %v1604
        %v1606 = vand.u32 %v1485, 4294901760
        %1607 = vmatmul.f32.gmra.mxu0 %v1606
        %v1608 = vpop.f32.mrf.mxu0
        %v1609 = vadd.f32 %v1585, %v1608
        %1610 = vdwg.mxu0
        %1611 = vmatpush.msra.mxu0 0.0
        %1612 = vmatpush.msra.mxu0 0.0
        %1613 = vmatpush.msra.mxu0 0.0
        %1614 = vmatpush.msra.mxu0 0.0
        %1615 = vmatpush.msra.mxu0 0.0
        %1616 = vmatpush.msra.mxu0 0.0
        %1617 = vmatpush.msra.mxu0 0.0
        %1618 = vmatpush.msra.mxu0 0.0
        %1619 = vmatpush.msra.mxu0 0.0
        %1620 = vmatpush.msra.mxu0 0.0
        %1621 = vmatpush.msra.mxu0 0.0
        %1622 = vmatpush.msra.mxu0 0.0
        %1623 = vmatpush.msra.mxu0 0.0
        %1624 = vmatpush.msra.mxu0 0.0
        %1625 = vmatpush.msra.mxu0 0.0
        %v1626 = vand.u32 %v326, 4294901760
        %1627 = vmatpush.msra.mxu0 %v1626
        %v1628 = vand.u32 %v1485, 4294901760
        %1629 = vmatmul.f32.gmra.mxu0 %v1628
        %v1630 = vpop.f32.mrf.mxu0
        %v1631 = vadd.f32 %v1609, %v1630
        %1632 = vdwg.mxu0
        %1633 = vst.msk [vmem:[%s302] sm:$0xff] %vm327, %v1184
        %1634 = vst.msk [vmem:[%s302 + $0x8] sm:$0xff] %vm327, %v1333
        %1635 = vst.msk [vmem:[%s302 + $0x10] sm:$0xff] %vm327, %v1482
        %1636 = vst.msk [vmem:[%s302 + $0x18] sm:$0xff] %vm327, %v1631
        %1637 = vst.msk [vmem:[%s309] sm:$0xff] %vm940, %v991
        %1638 = vst.msk [vmem:[%s309 + $0x8] sm:$0xff] %vm940, %v1006
        %1639 = vst.msk [vmem:[%s309 + $0x10] sm:$0xff] %vm940, %v1021
        %1640 = vst.msk [vmem:[%s309 + $0x18] sm:$0xff] %vm940, %v1036
        %s1641 = sand.u32 %s114, 1
        %s1642 = scalar_lea.sflag [#allocation4], %s1641
        %s1643 = sand.u32 %s114, 1
        %s1644 = smul.addr %s1643, 32
        %s1645 = scalar_lea.vmem [#allocation8], %s1644
        %s1646 = sand.u32 %s140, 1
        %s1647 = scalar_lea.sflag [#allocation10], %s1646
        %s1648 = sand.u32 %s140, 1
        %s1649 = smul.addr %s1648, 32
        %s1650 = scalar_lea.vmem [#allocation9], %s1649
        // Predicated region
        $region45: #{tpu_custom_call.1} parent=31 // pred_check
          %p1651 = pneg %p124
        $region46: #{tpu_custom_call.1} parent=31 // pred_check_branch
          %1653 = sbr.rel (%p1651) target = $region48
        $region47: #{tpu_custom_call.1} parent=31 // pred_region
          %s1654 = smul.u32 4, %s28
          %1656 = vsyncadd %s1642, 0
          %s1657 = smul.addr %s1654, 8
          %s1658 = scalar_lea.hbm %s3, %s1657
          %s1659 = sshll.u32 %s1645, 4
          %s1660 = int_to_ptr.vmem [resolvable:$true] %s1659
          %s1661 = sshll.u32 %s1658, 4
          %s1662 = int_to_ptr.hbm [resolvable:$true] %s1661
          %1667 = dma.vmem_to_hbm [thread:$0]  %s1660, 512, %s1662, %s1642, 128, 128, 8
        $region48: #{tpu_custom_call.1} parent=31 // pred_fallthru
          _
        // Predicated region
        $region49: #{tpu_custom_call.1} parent=31 // pred_check
          %p1668 = pneg %p150
        $region50: #{tpu_custom_call.1} parent=31 // pred_check_branch
          %1670 = sbr.rel (%p1668) target = $region52
        $region51: #{tpu_custom_call.1} parent=31 // pred_region
          %s1671 = smul.u32 4, %s28
          %1673 = vsyncadd %s1647, 0
          %s1674 = smul.addr %s1671, 8
          %s1675 = scalar_lea.hbm %s4, %s1674
          %s1676 = sshll.u32 %s1650, 4
          %s1677 = int_to_ptr.vmem [resolvable:$true] %s1676
          %s1678 = sshll.u32 %s1675, 4
          %s1679 = int_to_ptr.hbm [resolvable:$true] %s1678
          %1684 = dma.vmem_to_hbm [thread:$0]  %s1677, 512, %s1679, %s1647, 128, 128, 8
        $region52: #{tpu_custom_call.1} parent=31 // pred_fallthru
          _
      $region32: #{tpu_custom_call.1} parent=5 // pred_fallthru
        _
      %p1685 = scmp.le.s32.totalorder 2, %s23
      // Predicated region
      $region53: #{tpu_custom_call.1} parent=5 // pred_check
        %p1686 = pneg %p1685
      $region54: #{tpu_custom_call.1} parent=5 // pred_check_branch
        %1688 = sbr.rel (%p1686) target = $region56
      $region55: #{tpu_custom_call.1} parent=5 // pred_region
        %s1689 = ssub.s32 %s23, 2
        // Predicated region
        $region57: #{tpu_custom_call.1} parent=55 // pred_check
          %p1690 = pneg %p130
        $region58: #{tpu_custom_call.1} parent=55 // pred_check_branch
          %1692 = sbr.rel (%p1690) target = $region60
        $region59: #{tpu_custom_call.1} parent=55 // pred_region
          %s1693 = sand.u32 %s115, 1
          %s1694 = scalar_lea.sflag [#allocation4], %s1693
          %s1695 = sand.u32 %s115, 1
          %s1696 = smul.addr %s1695, 32
          %s1697 = scalar_lea.vmem [#allocation8], %s1696
          %1699 = dma.done %s1694, 512
        $region60: #{tpu_custom_call.1} parent=55 // pred_fallthru
          _
        // Predicated region
        $region61: #{tpu_custom_call.1} parent=55 // pred_check
          %p1700 = pneg %p156
        $region62: #{tpu_custom_call.1} parent=55 // pred_check_branch
          %1702 = sbr.rel (%p1700) target = $region64
        $region63: #{tpu_custom_call.1} parent=55 // pred_region
          %s1703 = sand.u32 %s141, 1
          %s1704 = scalar_lea.sflag [#allocation10], %s1703
          %s1705 = sand.u32 %s141, 1
          %s1706 = smul.addr %s1705, 32
          %s1707 = scalar_lea.vmem [#allocation9], %s1706
          %1709 = dma.done %s1704, 512
        $region64: #{tpu_custom_call.1} parent=55 // pred_fallthru
          _
      $region56: #{tpu_custom_call.1} parent=5 // pred_fallthru
        _
    $region6: #{tpu_custom_call.1} parent=1 // loop_footer
      %s27 = sadd.s32 1, %s23
    $region7: #{tpu_custom_call.1} parent=1 // loop_footer_branch
      %22 = sbr.rel target = $region3
    $region8: #{tpu_custom_call.1} parent=1 // loop_exit
      _
    %1710 = vsyncpa [#allocation3], 1
    %s1711 = scalar_lea.sflag [#allocation3], 1
    %1712 = vsyncpa %s1711, 1
    %1713 = vsyncpa [#allocation6], 1
    %s1714 = scalar_lea.sflag [#allocation6], 1
    %1715 = vsyncpa %s1714, 1
    %1716 = vsyncpa [#allocation4], 1
    %s1717 = scalar_lea.sflag [#allocation4], 1
    %1718 = vsyncpa %s1717, 1
    %1719 = vsyncpa [#allocation10], 1
    %s1720 = scalar_lea.sflag [#allocation10], 1
    %1721 = vsyncpa %s1720, 1

</llo_original>
